<compile_context>
chip_gen: v5e
topology: v5e:2x2
jax: 0.10.0
libtpu: 0.0.40
codegen_flags: <defaults>
</compile_context>

<pallas_src>
import functools

import jax
import jax.numpy as jnp
from jax.experimental import pallas as pl
from jax.experimental.pallas import tpu as pltpu


# Packed small-parameter rows of lnb_small (per layer):
#   0: ln1_w  1: ln1_b  2: b_out  3: ln2_w  4: ln2_b  5: b_proj


def _tf_layernorm(x, w, b, eps=1e-12):
    # TF-style LayerNorm (epsilon inside the sqrt), matching the custom LayerNorm class.
    u = jnp.mean(x, axis=-1, keepdims=True)
    xc = x - u
    s = jnp.mean(jnp.square(xc), axis=-1, keepdims=True)
    return w * (xc * jax.lax.rsqrt(s + eps)) + b


def fused_transf_kernel(
    x_ref,        # (bb, T, D) f32   original input tile (resident across layers)
    pos_ref,      # (T, D)     f32   frame position embeddings rows 0..T-1
    lnb_ref,      # (6, D)     f32   packed LN weights/biases + attn/mlp out biases
    bqkv_ref,     # (1, 3D)    f32   packed [b_q*scale, b_k, b_v]
    bfc_ref,      # (1, 4D)    f32   c_fc bias
    wqkv_ref,     # (D, 3D)    bf16  attn in_proj weight (Q cols pre-scaled)
    wout_ref,     # (D, D)     bf16  attn out_proj weight
    wfc_ref,      # (D, 4D)    bf16  mlp c_fc weight
    wproj_ref,    # (4D, D)    bf16  mlp c_proj weight
    o_ref,        # (bb, 1, D) f32   output: (transformer(x) + x).mean(axis=1)
    xs_ref,       # (bb, T, D) f32   VMEM scratch: activation carried across layers
    xmean_ref,    # (bb, 1, D) f32   VMEM scratch: mean(x_original, axis=1)
    *, n_head,
):
    layer = pl.program_id(1)
    n_layers = pl.num_programs(1)
    B, T, D = xs_ref.shape
    Dh = D // n_head

    @pl.when(layer == 0)
    def _init():
        # x = x + frame_position_embeddings (broadcast over batch);
        # stash mean(x_original, axis=1) for the final residual+mean.
        xs_ref[...] = x_ref[...] + pos_ref[...][None, :, :]
        xmean_ref[...] = jnp.mean(x_ref[...], axis=1, keepdims=True)

    # ---- unpack packed per-layer (1, D) params (static sublane slices; cheap) --
    lnb = lnb_ref[...]
    ln1_w, ln1_b = lnb[0:1], lnb[1:2]
    b_out = lnb[2:3]
    ln2_w, ln2_b = lnb[3:4], lnb[4:5]
    b_proj = lnb[5:6]

    x3 = xs_ref[...]                       # (B, T, D) f32 residual stream
    x2 = x3.reshape(B * T, D)

    # ---------------- attention branch: x = x + MHA(LN1(x)) ----------------
    ln1 = _tf_layernorm(x2, ln1_w, ln1_b)                       # f32
    qkv = jnp.dot(ln1.astype(jnp.bfloat16), wqkv_ref[...],
                  preferred_element_type=jnp.float32) + bqkv_ref[...]   # (B*T, 3D) f32
    q3 = qkv[:, :D].reshape(B, T, D)       # already scaled by Dh^-0.5 (folded)
    k3 = qkv[:, D:2 * D].reshape(B, T, D)
    v3 = qkv[:, 2 * D:].reshape(B, T, D)

    # Per-head scores/softmax/context (batched over B, no head-split transposes),
    # then ONE fused full-K output projection with w_out.
    ctx_heads = []
    for h in range(n_head):
        sl = slice(h * Dh, (h + 1) * Dh)
        qh = q3[:, :, sl].astype(jnp.bfloat16)
        kh = k3[:, :, sl].astype(jnp.bfloat16)
        vh = v3[:, :, sl].astype(jnp.bfloat16)
        s = jnp.einsum("btd,bsd->bts", qh, kh,
                       preferred_element_type=jnp.float32)      # f32 scores
        s = s - jnp.max(s, axis=-1, keepdims=True)
        p = jnp.exp(s)
        p = p * pl.reciprocal(jnp.sum(p, axis=-1, keepdims=True), approx=True)
        ctx_heads.append(
            jnp.einsum("bts,bsd->btd", p.astype(jnp.bfloat16), vh,
                       preferred_element_type=jnp.float32))
    ctx = jnp.concatenate(ctx_heads, axis=-1).reshape(B * T, D)
    attn_out = jnp.dot(ctx.astype(jnp.bfloat16), wout_ref[...],
                       preferred_element_type=jnp.float32)
    x2 = x2 + attn_out + b_out

    # -------------- MLP branch: x = x + c_proj(QuickGELU(c_fc(LN2(x)))) ----
    ln2 = _tf_layernorm(x2, ln2_w, ln2_b)
    hh = jnp.dot(ln2.astype(jnp.bfloat16), wfc_ref[...],
                 preferred_element_type=jnp.float32) + bfc_ref[...]
    hh = hh * jax.nn.sigmoid(1.702 * hh)            # QuickGELU (f32)
    x2 = x2 + jnp.dot(hh.astype(jnp.bfloat16), wproj_ref[...],
                      preferred_element_type=jnp.float32) + b_proj

    xs_ref[...] = x2.reshape(B, T, D)

    @pl.when(layer == n_layers - 1)
    def _finalize():
        # x = transformer_out + x_original ; return x.mean(dim=1)
        o_ref[...] = (jnp.mean(x2.reshape(B, T, D), axis=1, keepdims=True)
                      + xmean_ref[...])


# ------------------------------- wrapper ------------------------------------


def visual_prompt_transf_forward(x, params, n_head, batch_tiles=None):
    """Forward of visual_prompt with sim_header == 'Transf'.

    x: (B, T, D) float32.  Returns (B, D) float32.
    """
    b, t, d = x.shape
    assert d % n_head == 0
    n_layers = params["w_qkv"].shape[0]
    dh = d // n_head
    scale = dh ** -0.5

    if batch_tiles is None:
        batch_tiles = 2 if b % 2 == 0 else 1   # 2 TensorCores on v7x
    assert b % batch_tiles == 0
    bb = b // batch_tiles

    pos = params["pos_embed"][:t]              # Embedding at arange(t) == row slice

    # ---- one-time host-side weight transforms (zero per-step cost) ----------
    lnb = params["lnb_pack"]                   # (L, 9, D): module-semantics pack
    lnb_small = jnp.take(lnb, jnp.array([0, 1, 5, 6, 7, 8]), axis=1)   # (L, 6, D)
    b_qkv = jnp.concatenate(
        [lnb[:, 2:3, :] * scale, lnb[:, 3:4, :], lnb[:, 4:5, :]], axis=-1)  # (L,1,3D)

    w_qkv = params["w_qkv"].astype(jnp.float32)
    w_qkv = w_qkv.at[:, :, :d].multiply(scale)             # fold 1/sqrt(Dh) into Q cols
    w_qkv = w_qkv.astype(jnp.bfloat16)
    w_out = params["w_out"].astype(jnp.bfloat16)
    w_fc = params["w_fc"].astype(jnp.bfloat16)
    w_proj = params["w_proj"].astype(jnp.bfloat16)

    kernel = functools.partial(fused_transf_kernel, n_head=n_head)
    out = pl.pallas_call(
        kernel,
        out_shape=jax.ShapeDtypeStruct((b, 1, d), jnp.float32),
        grid=(batch_tiles, n_layers),
        in_specs=[
            pl.BlockSpec((bb, t, d), lambda bi, l: (bi, 0, 0)),        # x tile
            pl.BlockSpec((t, d), lambda bi, l: (0, 0)),                # pos (loaded once)
            pl.BlockSpec((None, 6, d), lambda bi, l: (l, 0, 0)),       # packed LN/bias rows
            pl.BlockSpec((None, 1, 3 * d), lambda bi, l: (l, 0, 0)),   # b_qkv (q pre-scaled)
            pl.BlockSpec((None, 1, 4 * d), lambda bi, l: (l, 0, 0)),   # b_fc
            pl.BlockSpec((None, d, 3 * d), lambda bi, l: (l, 0, 0)),   # w_qkv (bf16)
            pl.BlockSpec((None, d, d), lambda bi, l: (l, 0, 0)),       # w_out (bf16)
            pl.BlockSpec((None, d, 4 * d), lambda bi, l: (l, 0, 0)),   # w_fc (bf16)
            pl.BlockSpec((None, 4 * d, d), lambda bi, l: (l, 0, 0)),   # w_proj (bf16)
        ],
        out_specs=pl.BlockSpec((bb, 1, d), lambda bi, l: (bi, 0, 0)),
        scratch_shapes=[pltpu.VMEM((bb, t, d), jnp.float32),   # resident activation
                        pltpu.VMEM((bb, 1, d), jnp.float32)],  # mean(x_original)
        compiler_params=pltpu.CompilerParams(
            dimension_semantics=("parallel", "arbitrary"),
            vmem_limit_bytes=48 << 20,   # fits v7x 64 MiB; headroom on v5e/v6e
        ),
    )(x, pos, lnb_small, b_qkv, params["b_fc"], w_qkv, w_out, w_fc, w_proj)
    return out[:, 0, :]


# ----------------------- deterministic parameter init ----------------------


def init_params(key, context_length, embed_dim, n_layers):
    D = embed_dim
    ks = jax.random.split(key, 7)
    pos_embed = 0.02 * jax.random.normal(ks[0], (context_length, D), jnp.float32)

    # Stacked, pre-transposed weights (leading layer axis -> grid over layers),
    # stored in bf16: they are the streamed HBM traffic and MXU operands.
    w_qkv = (0.02 * jax.random.normal(ks[1], (n_layers, D, 3 * D), jnp.float32)).astype(jnp.bfloat16)
    w_out = (0.02 * jax.random.normal(ks[2], (n_layers, D, D), jnp.float32)).astype(jnp.bfloat16)
    w_fc = (0.02 * jax.random.normal(ks[3], (n_layers, D, 4 * D), jnp.float32)).astype(jnp.bfloat16)
    w_proj = (0.02 * jax.random.normal(ks[4], (n_layers, 4 * D, D), jnp.float32)).astype(jnp.bfloat16)

    # Packed small per-layer params (module semantics), rows:
    # [ln1_w, ln1_b, b_q, b_k, b_v, b_out, ln2_w, ln2_b, b_proj].
    # (The module's init would zero biases / set LN weights to 1; small random
    #  values are used so the pack/unpack path is actually exercised.)
    lnb = 0.02 * jax.random.normal(ks[5], (n_layers, 9, D), jnp.float32)
    lnb = lnb.at[:, 0, :].add(1.0)    # ln1_w ~ 1
    lnb = lnb.at[:, 6, :].add(1.0)    # ln2_w ~ 1
    b_fc = 0.02 * jax.random.normal(ks[6], (n_layers, 1, 4 * D), jnp.float32)

    return {"pos_embed": pos_embed, "lnb_pack": lnb, "b_fc": b_fc,
            "w_qkv": w_qkv, "w_out": w_out, "w_fc": w_fc, "w_proj": w_proj}


# ----------------------------- pure-JAX reference ---------------------------


def reference_forward(x, params, n_head):
    # Mirrors the PyTorch module: (B,T,D) -> +pos -> permute(1,0,2) ->
    # 6 x ResidualAttentionBlock (head-split MHA) -> permute back -> +x -> mean.
    # All math in f32 (weights are upcast from their stored bf16 values).
    b, t, D = x.shape
    Dh = D // n_head
    x_original = x
    x = x + params["pos_embed"][:t][None]
    x = jnp.transpose(x, (1, 0, 2))                # (L, N, D)
    L, N, _ = x.shape
    n_layers = params["w_qkv"].shape[0]
    for i in range(n_layers):
        lnb = params["lnb_pack"][i]
        ln1_w, ln1_b = lnb[0:1], lnb[1:2]
        b_q, b_k, b_v, b_out = lnb[2:3], lnb[3:4], lnb[4:5], lnb[5:6]
        ln2_w, ln2_b, b_proj = lnb[6:7], lnb[7:8], lnb[8:9]
        w_qkv = params["w_qkv"][i].astype(jnp.float32)
        w_out = params["w_out"][i].astype(jnp.float32)
        w_fc = params["w_fc"][i].astype(jnp.float32)
        w_proj = params["w_proj"][i].astype(jnp.float32)
        b_fc = params["b_fc"][i]

        x2 = x.reshape(L * N, D)
        u = jnp.mean(x2, -1, keepdims=True)
        s = jnp.mean((x2 - u) ** 2, -1, keepdims=True)
        ln1 = ln1_w * ((x2 - u) / jnp.sqrt(s + 1e-12)) + ln1_b
        qkv = ln1 @ w_qkv
        q = qkv[:, :D] + b_q
        k = qkv[:, D:2 * D] + b_k
        v = qkv[:, 2 * D:] + b_v

        def sh(tns):
            return tns.reshape(L, N, n_head, Dh).transpose(1, 2, 0, 3).reshape(N * n_head, L, Dh)

        qh, kh, vh = sh(q) * (Dh ** -0.5), sh(k), sh(v)
        sc = jnp.einsum("bld,bmd->blm", qh, kh)
        p = jax.nn.softmax(sc, axis=-1)
        ctx = jnp.einsum("blm,bmd->bld", p, vh)
        ctx = ctx.reshape(N, n_head, L, Dh).transpose(2, 0, 1, 3).reshape(L * N, D)
        x2 = x2 + (ctx @ w_out + b_out)

        u = jnp.mean(x2, -1, keepdims=True)
        s = jnp.mean((x2 - u) ** 2, -1, keepdims=True)
        ln2 = ln2_w * ((x2 - u) / jnp.sqrt(s + 1e-12)) + ln2_b
        h = ln2 @ w_fc + b_fc
        h = h * jax.nn.sigmoid(1.702 * h)
        x2 = x2 + (h @ w_proj + b_proj)
        x = x2.reshape(L, N, D)
    x = jnp.transpose(x, (1, 0, 2))
    return jnp.mean(x + x_original, axis=1)


# --------------------------------- main -------------------------------------


if __name__ == "__main__":
    B, T, D = 2, 8, 32          # batch, clip length, embed dim
    N_HEAD = 4                  # head_dim = 8
    N_LAYERS = 6                # TemporalTransformer(layers=6)
    CONTEXT_LENGTH = 16         # frame_position_embeddings rows (>= T)

    key = jax.random.PRNGKey(0)
    k_x, k_p = jax.random.split(key)
    x = jax.random.normal(k_x, (B, T, D), jnp.float32)
    params = init_params(k_p, CONTEXT_LENGTH, D, N_LAYERS)

    out = jax.block_until_ready(visual_prompt_transf_forward(x, params, N_HEAD))
    ref = jax.block_until_ready(reference_forward(x, params, N_HEAD))

    assert out.shape == (B, D)
    assert jnp.allclose(out, ref, atol=2e-2, rtol=2e-2), "mismatch vs JAX reference"

    print("KERNEL_OK")
</pallas_src>

<mosaic_0001>
module attributes {stable_mosaic.version = 11 : i64} {
  func.func @fused_transf_kernel(%arg0: i32, %arg1: i32, %arg2: memref<1x8x32xf32, #tpu.memory_space<vmem>>, %arg3: memref<8x32xf32, #tpu.memory_space<vmem>>, %arg4: memref<1x6x32xf32, #tpu.memory_space<vmem>>, %arg5: memref<1x1x96xf32, #tpu.memory_space<vmem>>, %arg6: memref<1x1x128xf32, #tpu.memory_space<vmem>>, %arg7: memref<1x32x96xbf16, #tpu.memory_space<vmem>>, %arg8: memref<1x32x32xbf16, #tpu.memory_space<vmem>>, %arg9: memref<1x32x128xbf16, #tpu.memory_space<vmem>>, %arg10: memref<1x128x32xbf16, #tpu.memory_space<vmem>>, %arg11: memref<1x1x32xf32, #tpu.memory_space<vmem>>, %arg12: memref<1x8x32xf32, #tpu.memory_space<vmem>>, %arg13: memref<1x1x32xf32, #tpu.memory_space<vmem>>) attributes {dimension_semantics = [#tpu.dimension_semantics<parallel>, #tpu.dimension_semantics<arbitrary>], iteration_bounds = array<i64: 2, 6>, scalar_prefetch = 0 : i64, scratch_operands = 2 : i64, tpu.core_type = #tpu.core_type<tc>, window_params = [{transform_indices = @transform_0, window_bounds = array<i64: 1, 8, 32>}, {pipeline_mode = #tpu.pipeline_mode<synchronous>, transform_indices = @transform_1, window_bounds = array<i64: 8, 32>}, {transform_indices = @transform_2, window_bounds = array<i64: 1, 6, 32>}, {transform_indices = @transform_3, window_bounds = array<i64: 1, 1, 96>}, {transform_indices = @transform_4, window_bounds = array<i64: 1, 1, 128>}, {transform_indices = @transform_5, window_bounds = array<i64: 1, 32, 96>}, {transform_indices = @transform_6, window_bounds = array<i64: 1, 32, 32>}, {transform_indices = @transform_7, window_bounds = array<i64: 1, 32, 128>}, {transform_indices = @transform_8, window_bounds = array<i64: 1, 128, 32>}, {transform_indices = @transform_9, window_bounds = array<i64: 1, 1, 32>}]} {
    %c0_i32 = arith.constant 0 : i32
    %0 = arith.cmpi eq, %arg1, %c0_i32 : i32
    %1 = arith.extui %0 : i1 to i32
    %c0_i32_0 = arith.constant 0 : i32
    %2 = arith.cmpi ne, %1, %c0_i32_0 : i32
    scf.if %2 {
      %c0_59 = arith.constant 0 : index
      %c0_60 = arith.constant 0 : index
      %c0_61 = arith.constant 0 : index
      %180 = vector.load %arg2[%c0_59, %c0_60, %c0_61] : memref<1x8x32xf32, #tpu.memory_space<vmem>>, vector<1x8x32xf32>
      %c0_62 = arith.constant 0 : index
      %c0_63 = arith.constant 0 : index
      %181 = vector.load %arg3[%c0_62, %c0_63] : memref<8x32xf32, #tpu.memory_space<vmem>>, vector<8x32xf32>
      %182 = vector.shape_cast %181 : vector<8x32xf32> to vector<1x8x32xf32>
      %183 = arith.addf %180, %182 : vector<1x8x32xf32>
      %c0_64 = arith.constant 0 : index
      %c0_65 = arith.constant 0 : index
      %c0_66 = arith.constant 0 : index
      %184 = vector.load %arg12[%c0_64, %c0_65, %c0_66] : memref<1x8x32xf32, #tpu.memory_space<vmem>>, vector<1x8x32xf32>
      tpu.vector_store %arg12[%c0_64, %c0_65, %c0_66], %183 {strides = array<i32>} : memref<1x8x32xf32, #tpu.memory_space<vmem>>, vector<1x8x32xf32>,
      %c0_67 = arith.constant 0 : index
      %c0_68 = arith.constant 0 : index
      %c0_69 = arith.constant 0 : index
      %185 = vector.load %arg2[%c0_67, %c0_68, %c0_69] : memref<1x8x32xf32, #tpu.memory_space<vmem>>, vector<1x8x32xf32>
      %cst_70 = arith.constant dense<0.000000e+00> : vector<1x32xf32>
      %186 = vector.multi_reduction <add>, %185, %cst_70 [1] : vector<1x8x32xf32> to vector<1x32xf32>
      %187 = vector.shape_cast %186 : vector<1x32xf32> to vector<1x1x32xf32>
      %cst_71 = arith.constant 8.000000e+00 : f32
      %188 = vector.broadcast %cst_71 : f32 to vector<1x1x32xf32>
      %189 = arith.divf %187, %188 : vector<1x1x32xf32>
      %c0_72 = arith.constant 0 : index
      %c0_73 = arith.constant 0 : index
      %c0_74 = arith.constant 0 : index
      %190 = vector.load %arg13[%c0_72, %c0_73, %c0_74] : memref<1x1x32xf32, #tpu.memory_space<vmem>>, vector<1x1x32xf32>
      tpu.vector_store %arg13[%c0_72, %c0_73, %c0_74], %189 {strides = array<i32>} : memref<1x1x32xf32, #tpu.memory_space<vmem>>, vector<1x1x32xf32>,
    } else {
    }
    %c0 = arith.constant 0 : index
    %c0_1 = arith.constant 0 : index
    %c0_2 = arith.constant 0 : index
    %3 = vector.load %arg4[%c0, %c0_1, %c0_2] : memref<1x6x32xf32, #tpu.memory_space<vmem>>, vector<1x6x32xf32>
    %4 = vector.shape_cast %3 : vector<1x6x32xf32> to vector<6x32xf32>
    %5 = vector.extract_strided_slice %4 {offsets = [0, 0], sizes = [1, 32], strides = [1, 1]} : vector<6x32xf32> to vector<1x32xf32>
    %6 = vector.extract_strided_slice %4 {offsets = [1, 0], sizes = [1, 32], strides = [1, 1]} : vector<6x32xf32> to vector<1x32xf32>
    %7 = vector.extract_strided_slice %4 {offsets = [2, 0], sizes = [1, 32], strides = [1, 1]} : vector<6x32xf32> to vector<1x32xf32>
    %8 = vector.extract_strided_slice %4 {offsets = [3, 0], sizes = [1, 32], strides = [1, 1]} : vector<6x32xf32> to vector<1x32xf32>
    %9 = vector.extract_strided_slice %4 {offsets = [4, 0], sizes = [1, 32], strides = [1, 1]} : vector<6x32xf32> to vector<1x32xf32>
    %10 = vector.extract_strided_slice %4 {offsets = [5, 0], sizes = [1, 32], strides = [1, 1]} : vector<6x32xf32> to vector<1x32xf32>
    %c0_3 = arith.constant 0 : index
    %c0_4 = arith.constant 0 : index
    %c0_5 = arith.constant 0 : index
    %11 = vector.load %arg12[%c0_3, %c0_4, %c0_5] : memref<1x8x32xf32, #tpu.memory_space<vmem>>, vector<1x8x32xf32>
    %12 = vector.shape_cast %11 : vector<1x8x32xf32> to vector<8x32xf32>
    %cst = arith.constant dense<0.000000e+00> : vector<8xf32>
    %13 = vector.multi_reduction <add>, %12, %cst [1] : vector<8x32xf32> to vector<8xf32>
    %14 = vector.shape_cast %13 : vector<8xf32> to vector<8x1xf32>
    %cst_6 = arith.constant 3.200000e+01 : f32
    %15 = vector.broadcast %cst_6 : f32 to vector<8x1xf32>
    %16 = arith.divf %14, %15 : vector<8x1xf32>
    %17 = vector.broadcast %16 : vector<8x1xf32> to vector<8x32xf32>
    %18 = arith.subf %12, %17 : vector<8x32xf32>
    %19 = arith.mulf %18, %18 : vector<8x32xf32>
    %cst_7 = arith.constant dense<0.000000e+00> : vector<8xf32>
    %20 = vector.multi_reduction <add>, %19, %cst_7 [1] : vector<8x32xf32> to vector<8xf32>
    %21 = vector.shape_cast %20 : vector<8xf32> to vector<8x1xf32>
    %cst_8 = arith.constant 3.200000e+01 : f32
    %22 = vector.broadcast %cst_8 : f32 to vector<8x1xf32>
    %23 = arith.divf %21, %22 : vector<8x1xf32>
    %cst_9 = arith.constant 9.99999996E-13 : f32
    %24 = vector.broadcast %cst_9 : f32 to vector<8x1xf32>
    %25 = arith.addf %23, %24 : vector<8x1xf32>
    %26 = math.rsqrt %25 : vector<8x1xf32>
    %27 = vector.broadcast %26 : vector<8x1xf32> to vector<8x32xf32>
    %28 = arith.mulf %18, %27 : vector<8x32xf32>
    %29 = vector.broadcast %5 : vector<1x32xf32> to vector<8x32xf32>
    %30 = arith.mulf %29, %28 : vector<8x32xf32>
    %31 = vector.broadcast %6 : vector<1x32xf32> to vector<8x32xf32>
    %32 = arith.addf %30, %31 : vector<8x32xf32>
    %33 = arith.truncf %32 : vector<8x32xf32> to vector<8x32xbf16>
    %c0_10 = arith.constant 0 : index
    %c0_11 = arith.constant 0 : index
    %c0_12 = arith.constant 0 : index
    %34 = vector.load %arg7[%c0_10, %c0_11, %c0_12] : memref<1x32x96xbf16, #tpu.memory_space<vmem>>, vector<1x32x96xbf16>
    %35 = vector.shape_cast %34 : vector<1x32x96xbf16> to vector<32x96xbf16>
    %cst_13 = arith.constant dense<0.000000e+00> : vector<8x96xf32>
    %36 = tpu.matmul %33, %35, %cst_13 {dimension_numbers = #tpu.dot_dimension_numbers<[1], [0], [0], [1], [0, 0, 1, 1], [], []>} : vector<8x32xbf16>, vector<32x96xbf16>, vector<8x96xf32> -> vector<8x96xf32>
    %c0_14 = arith.constant 0 : index
    %c0_15 = arith.constant 0 : index
    %c0_16 = arith.constant 0 : index
    %37 = vector.load %arg5[%c0_14, %c0_15, %c0_16] : memref<1x1x96xf32, #tpu.memory_space<vmem>>, vector<1x1x96xf32>
    %38 = vector.shape_cast %37 : vector<1x1x96xf32> to vector<1x96xf32>
    %39 = vector.broadcast %38 : vector<1x96xf32> to vector<8x96xf32>
    %40 = arith.addf %36, %39 : vector<8x96xf32>
    %41 = vector.extract_strided_slice %40 {offsets = [0, 0], sizes = [8, 32], strides = [1, 1]} : vector<8x96xf32> to vector<8x32xf32>
    %42 = vector.shape_cast %41 : vector<8x32xf32> to vector<1x8x32xf32>
    %43 = vector.extract_strided_slice %40 {offsets = [0, 32], sizes = [8, 32], strides = [1, 1]} : vector<8x96xf32> to vector<8x32xf32>
    %44 = vector.shape_cast %43 : vector<8x32xf32> to vector<1x8x32xf32>
    %45 = vector.extract_strided_slice %40 {offsets = [0, 64], sizes = [8, 32], strides = [1, 1]} : vector<8x96xf32> to vector<8x32xf32>
    %46 = vector.shape_cast %45 : vector<8x32xf32> to vector<1x8x32xf32>
    %47 = vector.extract_strided_slice %42 {offsets = [0, 0, 0], sizes = [1, 8, 8], strides = [1, 1, 1]} : vector<1x8x32xf32> to vector<1x8x8xf32>
    %48 = arith.truncf %47 : vector<1x8x8xf32> to vector<1x8x8xbf16>
    %49 = vector.extract_strided_slice %44 {offsets = [0, 0, 0], sizes = [1, 8, 8], strides = [1, 1, 1]} : vector<1x8x32xf32> to vector<1x8x8xf32>
    %50 = arith.truncf %49 : vector<1x8x8xf32> to vector<1x8x8xbf16>
    %51 = vector.extract_strided_slice %46 {offsets = [0, 0, 0], sizes = [1, 8, 8], strides = [1, 1, 1]} : vector<1x8x32xf32> to vector<1x8x8xf32>
    %52 = arith.truncf %51 : vector<1x8x8xf32> to vector<1x8x8xbf16>
    "tpu.trace_start"() <{level = 10 : i32, message = "btd,bsd->bts"}> : () -> ()
    %cst_17 = arith.constant dense<0.000000e+00> : vector<1x8x8xf32>
    %53 = tpu.matmul %48, %50, %cst_17 {dimension_numbers = #tpu.dot_dimension_numbers<[2], [2], [1], [1], [0, 0, 0, 1, 1, 1], [0], [0]>} : vector<1x8x8xbf16>, vector<1x8x8xbf16>, vector<1x8x8xf32> -> vector<1x8x8xf32>
    "tpu.trace_stop"() : () -> ()
    %cst_18 = arith.constant dense<0xFF800000> : vector<1x8xf32>
    %54 = vector.multi_reduction <maximumf>, %53, %cst_18 [2] : vector<1x8x8xf32> to vector<1x8xf32>
    %55 = vector.shape_cast %54 : vector<1x8xf32> to vector<1x8x1xf32>
    %56 = vector.broadcast %55 : vector<1x8x1xf32> to vector<1x8x8xf32>
    %57 = arith.subf %53, %56 : vector<1x8x8xf32>
    %58 = math.exp %57 : vector<1x8x8xf32>
    %cst_19 = arith.constant dense<0.000000e+00> : vector<1x8xf32>
    %59 = vector.multi_reduction <add>, %58, %cst_19 [2] : vector<1x8x8xf32> to vector<1x8xf32>
    %60 = vector.shape_cast %59 : vector<1x8xf32> to vector<1x8x1xf32>
    %61 = tpu.reciprocal %60 {approx = true} : vector<1x8x1xf32> -> vector<1x8x1xf32>
    %62 = vector.broadcast %61 : vector<1x8x1xf32> to vector<1x8x8xf32>
    %63 = arith.mulf %58, %62 : vector<1x8x8xf32>
    %64 = arith.truncf %63 : vector<1x8x8xf32> to vector<1x8x8xbf16>
    "tpu.trace_start"() <{level = 10 : i32, message = "bts,bsd->btd"}> : () -> ()
    %cst_20 = arith.constant dense<0.000000e+00> : vector<1x8x8xf32>
    %65 = tpu.matmul %64, %52, %cst_20 {dimension_numbers = #tpu.dot_dimension_numbers<[2], [1], [1], [2], [0, 0, 0, 1, 1, 2], [0], [0]>} : vector<1x8x8xbf16>, vector<1x8x8xbf16>, vector<1x8x8xf32> -> vector<1x8x8xf32>
    "tpu.trace_stop"() : () -> ()
    %66 = vector.extract_strided_slice %42 {offsets = [0, 0, 8], sizes = [1, 8, 8], strides = [1, 1, 1]} : vector<1x8x32xf32> to vector<1x8x8xf32>
    %67 = arith.truncf %66 : vector<1x8x8xf32> to vector<1x8x8xbf16>
    %68 = vector.extract_strided_slice %44 {offsets = [0, 0, 8], sizes = [1, 8, 8], strides = [1, 1, 1]} : vector<1x8x32xf32> to vector<1x8x8xf32>
    %69 = arith.truncf %68 : vector<1x8x8xf32> to vector<1x8x8xbf16>
    %70 = vector.extract_strided_slice %46 {offsets = [0, 0, 8], sizes = [1, 8, 8], strides = [1, 1, 1]} : vector<1x8x32xf32> to vector<1x8x8xf32>
    %71 = arith.truncf %70 : vector<1x8x8xf32> to vector<1x8x8xbf16>
    "tpu.trace_start"() <{level = 10 : i32, message = "btd,bsd->bts"}> : () -> ()
    %cst_21 = arith.constant dense<0.000000e+00> : vector<1x8x8xf32>
    %72 = tpu.matmul %67, %69, %cst_21 {dimension_numbers = #tpu.dot_dimension_numbers<[2], [2], [1], [1], [0, 0, 0, 1, 1, 1], [0], [0]>} : vector<1x8x8xbf16>, vector<1x8x8xbf16>, vector<1x8x8xf32> -> vector<1x8x8xf32>
    "tpu.trace_stop"() : () -> ()
    %cst_22 = arith.constant dense<0xFF800000> : vector<1x8xf32>
    %73 = vector.multi_reduction <maximumf>, %72, %cst_22 [2] : vector<1x8x8xf32> to vector<1x8xf32>
    %74 = vector.shape_cast %73 : vector<1x8xf32> to vector<1x8x1xf32>
    %75 = vector.broadcast %74 : vector<1x8x1xf32> to vector<1x8x8xf32>
    %76 = arith.subf %72, %75 : vector<1x8x8xf32>
    %77 = math.exp %76 : vector<1x8x8xf32>
    %cst_23 = arith.constant dense<0.000000e+00> : vector<1x8xf32>
    %78 = vector.multi_reduction <add>, %77, %cst_23 [2] : vector<1x8x8xf32> to vector<1x8xf32>
    %79 = vector.shape_cast %78 : vector<1x8xf32> to vector<1x8x1xf32>
    %80 = tpu.reciprocal %79 {approx = true} : vector<1x8x1xf32> -> vector<1x8x1xf32>
    %81 = vector.broadcast %80 : vector<1x8x1xf32> to vector<1x8x8xf32>
    %82 = arith.mulf %77, %81 : vector<1x8x8xf32>
    %83 = arith.truncf %82 : vector<1x8x8xf32> to vector<1x8x8xbf16>
    "tpu.trace_start"() <{level = 10 : i32, message = "bts,bsd->btd"}> : () -> ()
    %cst_24 = arith.constant dense<0.000000e+00> : vector<1x8x8xf32>
    %84 = tpu.matmul %83, %71, %cst_24 {dimension_numbers = #tpu.dot_dimension_numbers<[2], [1], [1], [2], [0, 0, 0, 1, 1, 2], [0], [0]>} : vector<1x8x8xbf16>, vector<1x8x8xbf16>, vector<1x8x8xf32> -> vector<1x8x8xf32>
    "tpu.trace_stop"() : () -> ()
    %85 = vector.extract_strided_slice %42 {offsets = [0, 0, 16], sizes = [1, 8, 8], strides = [1, 1, 1]} : vector<1x8x32xf32> to vector<1x8x8xf32>
    %86 = arith.truncf %85 : vector<1x8x8xf32> to vector<1x8x8xbf16>
    %87 = vector.extract_strided_slice %44 {offsets = [0, 0, 16], sizes = [1, 8, 8], strides = [1, 1, 1]} : vector<1x8x32xf32> to vector<1x8x8xf32>
    %88 = arith.truncf %87 : vector<1x8x8xf32> to vector<1x8x8xbf16>
    %89 = vector.extract_strided_slice %46 {offsets = [0, 0, 16], sizes = [1, 8, 8], strides = [1, 1, 1]} : vector<1x8x32xf32> to vector<1x8x8xf32>
    %90 = arith.truncf %89 : vector<1x8x8xf32> to vector<1x8x8xbf16>
    "tpu.trace_start"() <{level = 10 : i32, message = "btd,bsd->bts"}> : () -> ()
    %cst_25 = arith.constant dense<0.000000e+00> : vector<1x8x8xf32>
    %91 = tpu.matmul %86, %88, %cst_25 {dimension_numbers = #tpu.dot_dimension_numbers<[2], [2], [1], [1], [0, 0, 0, 1, 1, 1], [0], [0]>} : vector<1x8x8xbf16>, vector<1x8x8xbf16>, vector<1x8x8xf32> -> vector<1x8x8xf32>
    "tpu.trace_stop"() : () -> ()
    %cst_26 = arith.constant dense<0xFF800000> : vector<1x8xf32>
    %92 = vector.multi_reduction <maximumf>, %91, %cst_26 [2] : vector<1x8x8xf32> to vector<1x8xf32>
    %93 = vector.shape_cast %92 : vector<1x8xf32> to vector<1x8x1xf32>
    %94 = vector.broadcast %93 : vector<1x8x1xf32> to vector<1x8x8xf32>
    %95 = arith.subf %91, %94 : vector<1x8x8xf32>
    %96 = math.exp %95 : vector<1x8x8xf32>
    %cst_27 = arith.constant dense<0.000000e+00> : vector<1x8xf32>
    %97 = vector.multi_reduction <add>, %96, %cst_27 [2] : vector<1x8x8xf32> to vector<1x8xf32>
    %98 = vector.shape_cast %97 : vector<1x8xf32> to vector<1x8x1xf32>
    %99 = tpu.reciprocal %98 {approx = true} : vector<1x8x1xf32> -> vector<1x8x1xf32>
    %100 = vector.broadcast %99 : vector<1x8x1xf32> to vector<1x8x8xf32>
    %101 = arith.mulf %96, %100 : vector<1x8x8xf32>
    %102 = arith.truncf %101 : vector<1x8x8xf32> to vector<1x8x8xbf16>
    "tpu.trace_start"() <{level = 10 : i32, message = "bts,bsd->btd"}> : () -> ()
    %cst_28 = arith.constant dense<0.000000e+00> : vector<1x8x8xf32>
    %103 = tpu.matmul %102, %90, %cst_28 {dimension_numbers = #tpu.dot_dimension_numbers<[2], [1], [1], [2], [0, 0, 0, 1, 1, 2], [0], [0]>} : vector<1x8x8xbf16>, vector<1x8x8xbf16>, vector<1x8x8xf32> -> vector<1x8x8xf32>
    "tpu.trace_stop"() : () -> ()
    %104 = vector.extract_strided_slice %42 {offsets = [0, 0, 24], sizes = [1, 8, 8], strides = [1, 1, 1]} : vector<1x8x32xf32> to vector<1x8x8xf32>
    %105 = arith.truncf %104 : vector<1x8x8xf32> to vector<1x8x8xbf16>
    %106 = vector.extract_strided_slice %44 {offsets = [0, 0, 24], sizes = [1, 8, 8], strides = [1, 1, 1]} : vector<1x8x32xf32> to vector<1x8x8xf32>
    %107 = arith.truncf %106 : vector<1x8x8xf32> to vector<1x8x8xbf16>
    %108 = vector.extract_strided_slice %46 {offsets = [0, 0, 24], sizes = [1, 8, 8], strides = [1, 1, 1]} : vector<1x8x32xf32> to vector<1x8x8xf32>
    %109 = arith.truncf %108 : vector<1x8x8xf32> to vector<1x8x8xbf16>
    "tpu.trace_start"() <{level = 10 : i32, message = "btd,bsd->bts"}> : () -> ()
    %cst_29 = arith.constant dense<0.000000e+00> : vector<1x8x8xf32>
    %110 = tpu.matmul %105, %107, %cst_29 {dimension_numbers = #tpu.dot_dimension_numbers<[2], [2], [1], [1], [0, 0, 0, 1, 1, 1], [0], [0]>} : vector<1x8x8xbf16>, vector<1x8x8xbf16>, vector<1x8x8xf32> -> vector<1x8x8xf32>
    "tpu.trace_stop"() : () -> ()
    %cst_30 = arith.constant dense<0xFF800000> : vector<1x8xf32>
    %111 = vector.multi_reduction <maximumf>, %110, %cst_30 [2] : vector<1x8x8xf32> to vector<1x8xf32>
    %112 = vector.shape_cast %111 : vector<1x8xf32> to vector<1x8x1xf32>
    %113 = vector.broadcast %112 : vector<1x8x1xf32> to vector<1x8x8xf32>
    %114 = arith.subf %110, %113 : vector<1x8x8xf32>
    %115 = math.exp %114 : vector<1x8x8xf32>
    %cst_31 = arith.constant dense<0.000000e+00> : vector<1x8xf32>
    %116 = vector.multi_reduction <add>, %115, %cst_31 [2] : vector<1x8x8xf32> to vector<1x8xf32>
    %117 = vector.shape_cast %116 : vector<1x8xf32> to vector<1x8x1xf32>
    %118 = tpu.reciprocal %117 {approx = true} : vector<1x8x1xf32> -> vector<1x8x1xf32>
    %119 = vector.broadcast %118 : vector<1x8x1xf32> to vector<1x8x8xf32>
    %120 = arith.mulf %115, %119 : vector<1x8x8xf32>
    %121 = arith.truncf %120 : vector<1x8x8xf32> to vector<1x8x8xbf16>
    "tpu.trace_start"() <{level = 10 : i32, message = "bts,bsd->btd"}> : () -> ()
    %cst_32 = arith.constant dense<0.000000e+00> : vector<1x8x8xf32>
    %122 = tpu.matmul %121, %109, %cst_32 {dimension_numbers = #tpu.dot_dimension_numbers<[2], [1], [1], [2], [0, 0, 0, 1, 1, 2], [0], [0]>} : vector<1x8x8xbf16>, vector<1x8x8xbf16>, vector<1x8x8xf32> -> vector<1x8x8xf32>
    "tpu.trace_stop"() : () -> ()
    %123 = tpu.concatenate %65, %84, %103, %122 in 2 : vector<1x8x8xf32>, vector<1x8x8xf32>, vector<1x8x8xf32>, vector<1x8x8xf32> -> vector<1x8x32xf32>
    %124 = vector.shape_cast %123 : vector<1x8x32xf32> to vector<8x32xf32>
    %125 = arith.truncf %124 : vector<8x32xf32> to vector<8x32xbf16>
    %c0_33 = arith.constant 0 : index
    %c0_34 = arith.constant 0 : index
    %c0_35 = arith.constant 0 : index
    %126 = vector.load %arg8[%c0_33, %c0_34, %c0_35] : memref<1x32x32xbf16, #tpu.memory_space<vmem>>, vector<1x32x32xbf16>
    %127 = vector.shape_cast %126 : vector<1x32x32xbf16> to vector<32x32xbf16>
    %cst_36 = arith.constant dense<0.000000e+00> : vector<8x32xf32>
    %128 = tpu.matmul %125, %127, %cst_36 {dimension_numbers = #tpu.dot_dimension_numbers<[1], [0], [0], [1], [0, 0, 1, 1], [], []>} : vector<8x32xbf16>, vector<32x32xbf16>, vector<8x32xf32> -> vector<8x32xf32>
    %129 = arith.addf %12, %128 : vector<8x32xf32>
    %130 = vector.broadcast %7 : vector<1x32xf32> to vector<8x32xf32>
    %131 = arith.addf %129, %130 : vector<8x32xf32>
    %cst_37 = arith.constant dense<0.000000e+00> : vector<8xf32>
    %132 = vector.multi_reduction <add>, %131, %cst_37 [1] : vector<8x32xf32> to vector<8xf32>
    %133 = vector.shape_cast %132 : vector<8xf32> to vector<8x1xf32>
    %cst_38 = arith.constant 3.200000e+01 : f32
    %134 = vector.broadcast %cst_38 : f32 to vector<8x1xf32>
    %135 = arith.divf %133, %134 : vector<8x1xf32>
    %136 = vector.broadcast %135 : vector<8x1xf32> to vector<8x32xf32>
    %137 = arith.subf %131, %136 : vector<8x32xf32>
    %138 = arith.mulf %137, %137 : vector<8x32xf32>
    %cst_39 = arith.constant dense<0.000000e+00> : vector<8xf32>
    %139 = vector.multi_reduction <add>, %138, %cst_39 [1] : vector<8x32xf32> to vector<8xf32>
    %140 = vector.shape_cast %139 : vector<8xf32> to vector<8x1xf32>
    %cst_40 = arith.constant 3.200000e+01 : f32
    %141 = vector.broadcast %cst_40 : f32 to vector<8x1xf32>
    %142 = arith.divf %140, %141 : vector<8x1xf32>
    %cst_41 = arith.constant 9.99999996E-13 : f32
    %143 = vector.broadcast %cst_41 : f32 to vector<8x1xf32>
    %144 = arith.addf %142, %143 : vector<8x1xf32>
    %145 = math.rsqrt %144 : vector<8x1xf32>
    %146 = vector.broadcast %145 : vector<8x1xf32> to vector<8x32xf32>
    %147 = arith.mulf %137, %146 : vector<8x32xf32>
    %148 = vector.broadcast %8 : vector<1x32xf32> to vector<8x32xf32>
    %149 = arith.mulf %148, %147 : vector<8x32xf32>
    %150 = vector.broadcast %9 : vector<1x32xf32> to vector<8x32xf32>
    %151 = arith.addf %149, %150 : vector<8x32xf32>
    %152 = arith.truncf %151 : vector<8x32xf32> to vector<8x32xbf16>
    %c0_42 = arith.constant 0 : index
    %c0_43 = arith.constant 0 : index
    %c0_44 = arith.constant 0 : index
    %153 = vector.load %arg9[%c0_42, %c0_43, %c0_44] : memref<1x32x128xbf16, #tpu.memory_space<vmem>>, vector<1x32x128xbf16>
    %154 = vector.shape_cast %153 : vector<1x32x128xbf16> to vector<32x128xbf16>
    %cst_45 = arith.constant dense<0.000000e+00> : vector<8x128xf32>
    %155 = tpu.matmul %152, %154, %cst_45 {dimension_numbers = #tpu.dot_dimension_numbers<[1], [0], [0], [1], [0, 0, 1, 1], [], []>} : vector<8x32xbf16>, vector<32x128xbf16>, vector<8x128xf32> -> vector<8x128xf32>
    %c0_46 = arith.constant 0 : index
    %c0_47 = arith.constant 0 : index
    %c0_48 = arith.constant 0 : index
    %156 = vector.load %arg6[%c0_46, %c0_47, %c0_48] : memref<1x1x128xf32, #tpu.memory_space<vmem>>, vector<1x1x128xf32>
    %157 = vector.shape_cast %156 : vector<1x1x128xf32> to vector<1x128xf32>
    %158 = vector.broadcast %157 : vector<1x128xf32> to vector<8x128xf32>
    %159 = arith.addf %155, %158 : vector<8x128xf32>
    %cst_49 = arith.constant 1.702000e+00 : f32
    %160 = vector.broadcast %cst_49 : f32 to vector<8x128xf32>
    %161 = arith.mulf %160, %159 : vector<8x128xf32>
    %162 = arith.negf %161 : vector<8x128xf32>
    %163 = math.exp %162 : vector<8x128xf32>
    %cst_50 = arith.constant 1.000000e+00 : f32
    %164 = vector.broadcast %cst_50 : f32 to vector<8x128xf32>
    %165 = arith.addf %164, %163 : vector<8x128xf32>
    %166 = arith.divf %164, %165 : vector<8x128xf32>
    %167 = arith.mulf %159, %166 : vector<8x128xf32>
    %168 = arith.truncf %167 : vector<8x128xf32> to vector<8x128xbf16>
    %c0_51 = arith.constant 0 : index
    %c0_52 = arith.constant 0 : index
    %c0_53 = arith.constant 0 : index
    %169 = vector.load %arg10[%c0_51, %c0_52, %c0_53] : memref<1x128x32xbf16, #tpu.memory_space<vmem>>, vector<1x128x32xbf16>
    %170 = vector.shape_cast %169 : vector<1x128x32xbf16> to vector<128x32xbf16>
    %cst_54 = arith.constant dense<0.000000e+00> : vector<8x32xf32>
    %171 = tpu.matmul %168, %170, %cst_54 {dimension_numbers = #tpu.dot_dimension_numbers<[1], [0], [0], [1], [0, 0, 1, 1], [], []>} : vector<8x128xbf16>, vector<128x32xbf16>, vector<8x32xf32> -> vector<8x32xf32>
    %172 = arith.addf %131, %171 : vector<8x32xf32>
    %173 = vector.broadcast %10 : vector<1x32xf32> to vector<8x32xf32>
    %174 = arith.addf %172, %173 : vector<8x32xf32>
    %175 = vector.shape_cast %174 : vector<8x32xf32> to vector<1x8x32xf32>
    %c0_55 = arith.constant 0 : index
    %c0_56 = arith.constant 0 : index
    %c0_57 = arith.constant 0 : index
    %176 = vector.load %arg12[%c0_55, %c0_56, %c0_57] : memref<1x8x32xf32, #tpu.memory_space<vmem>>, vector<1x8x32xf32>
    tpu.vector_store %arg12[%c0_55, %c0_56, %c0_57], %175 {strides = array<i32>} : memref<1x8x32xf32, #tpu.memory_space<vmem>>, vector<1x8x32xf32>,
    %c5_i32 = arith.constant 5 : i32
    %177 = arith.cmpi eq, %arg1, %c5_i32 : i32
    %178 = arith.extui %177 : i1 to i32
    %c0_i32_58 = arith.constant 0 : i32
    %179 = arith.cmpi ne, %178, %c0_i32_58 : i32
    scf.if %179 {
      %180 = vector.shape_cast %174 : vector<8x32xf32> to vector<1x8x32xf32>
      %cst_59 = arith.constant dense<0.000000e+00> : vector<1x32xf32>
      %181 = vector.multi_reduction <add>, %180, %cst_59 [1] : vector<1x8x32xf32> to vector<1x32xf32>
      %182 = vector.shape_cast %181 : vector<1x32xf32> to vector<1x1x32xf32>
      %cst_60 = arith.constant 8.000000e+00 : f32
      %183 = vector.broadcast %cst_60 : f32 to vector<1x1x32xf32>
      %184 = arith.divf %182, %183 : vector<1x1x32xf32>
      %c0_61 = arith.constant 0 : index
      %c0_62 = arith.constant 0 : index
      %c0_63 = arith.constant 0 : index
      %185 = vector.load %arg13[%c0_61, %c0_62, %c0_63] : memref<1x1x32xf32, #tpu.memory_space<vmem>>, vector<1x1x32xf32>
      %186 = arith.addf %184, %185 : vector<1x1x32xf32>
      %c0_64 = arith.constant 0 : index
      %c0_65 = arith.constant 0 : index
      %c0_66 = arith.constant 0 : index
      %187 = vector.load %arg11[%c0_64, %c0_65, %c0_66] : memref<1x1x32xf32, #tpu.memory_space<vmem>>, vector<1x1x32xf32>
      tpu.vector_store %arg11[%c0_64, %c0_65, %c0_66], %186 {strides = array<i32>} : memref<1x1x32xf32, #tpu.memory_space<vmem>>, vector<1x1x32xf32>,
    } else {
    }
    return
  }
  func.func @transform_0(%arg0: i32, %arg1: i32) -> (i32, i32, i32) {
    %c0_i32 = arith.constant 0 : i32
    %c0_i32_0 = arith.constant 0 : i32
    %c0_i32_1 = arith.constant 0 : i32
    return %arg0, %c0_i32, %c0_i32_0 : i32, i32, i32
  }
  func.func @transform_1(%arg0: i32, %arg1: i32) -> (i32, i32) {
    %c0_i32 = arith.constant 0 : i32
    %c0_i32_0 = arith.constant 0 : i32
    %c0_i32_1 = arith.constant 0 : i32
    return %c0_i32, %c0_i32_0 : i32, i32
  }
  func.func @transform_2(%arg0: i32, %arg1: i32) -> (i32, i32, i32) {
    %c0_i32 = arith.constant 0 : i32
    %c0_i32_0 = arith.constant 0 : i32
    %c0_i32_1 = arith.constant 0 : i32
    return %arg1, %c0_i32, %c0_i32_0 : i32, i32, i32
  }
  func.func @transform_3(%arg0: i32, %arg1: i32) -> (i32, i32, i32) {
    %c0_i32 = arith.constant 0 : i32
    %c0_i32_0 = arith.constant 0 : i32
    %c0_i32_1 = arith.constant 0 : i32
    return %arg1, %c0_i32, %c0_i32_0 : i32, i32, i32
  }
  func.func @transform_4(%arg0: i32, %arg1: i32) -> (i32, i32, i32) {
    %c0_i32 = arith.constant 0 : i32
    %c0_i32_0 = arith.constant 0 : i32
    %c0_i32_1 = arith.constant 0 : i32
    return %arg1, %c0_i32, %c0_i32_0 : i32, i32, i32
  }
  func.func @transform_5(%arg0: i32, %arg1: i32) -> (i32, i32, i32) {
    %c0_i32 = arith.constant 0 : i32
    %c0_i32_0 = arith.constant 0 : i32
    %c0_i32_1 = arith.constant 0 : i32
    return %arg1, %c0_i32, %c0_i32_0 : i32, i32, i32
  }
  func.func @transform_6(%arg0: i32, %arg1: i32) -> (i32, i32, i32) {
    %c0_i32 = arith.constant 0 : i32
    %c0_i32_0 = arith.constant 0 : i32
    %c0_i32_1 = arith.constant 0 : i32
    return %arg1, %c0_i32, %c0_i32_0 : i32, i32, i32
  }
  func.func @transform_7(%arg0: i32, %arg1: i32) -> (i32, i32, i32) {
    %c0_i32 = arith.constant 0 : i32
    %c0_i32_0 = arith.constant 0 : i32
    %c0_i32_1 = arith.constant 0 : i32
    return %arg1, %c0_i32, %c0_i32_0 : i32, i32, i32
  }
  func.func @transform_8(%arg0: i32, %arg1: i32) -> (i32, i32, i32) {
    %c0_i32 = arith.constant 0 : i32
    %c0_i32_0 = arith.constant 0 : i32
    %c0_i32_1 = arith.constant 0 : i32
    return %arg1, %c0_i32, %c0_i32_0 : i32, i32, i32
  }
  func.func @transform_9(%arg0: i32, %arg1: i32) -> (i32, i32, i32) {
    %c0_i32 = arith.constant 0 : i32
    %c0_i32_0 = arith.constant 0 : i32
    %c0_i32_1 = arith.constant 0 : i32
    return %arg0, %c0_i32, %c0_i32_0 : i32, i32, i32
  }
}

</mosaic_0001>

<llo_original>
// kernel: tpu_custom_call.1
$region0: #{tpu_custom_call.1}
  #allocation0 [shape = 'u32[]', space=smem, size = 0x4, offset = 0x4, fixed_abs, tag = 'smem constant byte address 0x4 - core index']
  #allocation1 [shape = 'u32[72,128]{1,0:T(1,128)}', space=vmem, size = 0x9000, scoped, tag = 'internal scratch']
  #allocation2 [shape = 'f32[1,8,32]{2,1,0:T(8,128)}', space=vmem, size = 0x1000, scoped, tag = 'scratch operand']
  #allocation3 [shape = 'f32[1,1,32]{2,1,0:T(1,128)}', space=vmem, size = 0x200, scoped, tag = 'scratch operand']
  %s0 = inlined_call_operand.vmem [shape: f32[2,8,32], index: 0, kind: input, shape index: {}]
  %s1 = inlined_call_operand.vmem [shape: f32[8,32], index: 1, kind: input, shape index: {}]
  %s2 = inlined_call_operand.vmem [shape: f32[6,6,32], index: 2, kind: input, shape index: {}]
  %s3 = inlined_call_operand.vmem [shape: f32[6,1,96], index: 3, kind: input, shape index: {}]
  %s4 = inlined_call_operand.vmem [shape: f32[6,1,128], index: 4, kind: input, shape index: {}]
  %s5 = inlined_call_operand.vmem [shape: bf16[6,32,96], index: 5, kind: input, shape index: {}]
  %s6 = inlined_call_operand.vmem [shape: bf16[6,32,32], index: 6, kind: input, shape index: {}]
  %s7 = inlined_call_operand.vmem [shape: bf16[6,32,128], index: 7, kind: input, shape index: {}]
  %s8 = inlined_call_operand.vmem [shape: bf16[6,128,32], index: 8, kind: input, shape index: {}]
  %s9 = inlined_call_operand.hbm [shape: f32[2,1,32], index: 9, kind: output, shape index: {}]
  %s10 = sld [smem:[#allocation0]]
  $region77: #{tpu_custom_call.1} parent=0
    _
  %s12 = ssub.s32 1, %s10
  %s13 = scalar_select 0, %s12, %s10
  $region1: #{tpu_custom_call.1} parent=0
    #allocation4 [shape = 'u8[1024]{0}', space=vmem, size = 0x400, scoped, tag = 'output window, operand 0']
    #allocation5 [shape = 's32[2]{0}', space=sflag, size = 0x8, scoped, tag = 'scoped memory for tpu_custom_call.1']
    %14 = vsyncpa [#allocation5], 0
    %s15 = scalar_lea.sflag [#allocation5], 1
    %16 = vsyncpa %s15, 0
    loop: start=0, step=1, limit=14
    $region2: #{tpu_custom_call.1} parent=1 // loop_pre_header
      _
    $region3: #{tpu_custom_call.1} parent=1 // loop_header
      %s18 = sphi 0, %s22
      %p19 = scmp.ge.s32.totalorder %s18, 14
      %s25 = sphi 0, %s37
      %s26 = sphi 0, %s33
      %s27 = sphi 0, %s25
      %s28 = sphi 0, %s26
      %s29 = sphi 0, %s27
      %s30 = sphi 0, %s28
      %s40 = sphi 0, %s42
      %s43 = sphi 0, %s40
      %s44 = sphi 0, %s43
      %s60 = sphi 0, %s44
      %s64 = sphi 0, %s64
      %s66 = sphi 0, %s64
      %s67 = sphi 0, %s66
      %s81 = sphi 0, %s67
      %s87 = sphi 0, %s89
      %s90 = sphi 0, %s87
      %s91 = sphi 0, %s90
      %s107 = sphi 0, %s91
      %s113 = sphi 0, %s115
      %s116 = sphi 0, %s113
      %s117 = sphi 0, %s116
      %s133 = sphi 0, %s117
      %s139 = sphi 0, %s141
      %s142 = sphi 0, %s139
      %s143 = sphi 0, %s142
      %s159 = sphi 0, %s143
      %s165 = sphi 0, %s167
      %s168 = sphi 0, %s165
      %s169 = sphi 0, %s168
      %s185 = sphi 0, %s169
      %s191 = sphi 0, %s193
      %s194 = sphi 0, %s191
      %s195 = sphi 0, %s194
      %s211 = sphi 0, %s195
      %s217 = sphi 0, %s219
      %s220 = sphi 0, %s217
      %s221 = sphi 0, %s220
      %s237 = sphi 0, %s221
      %s243 = sphi 0, %s245
      %s246 = sphi 0, %s243
      %s247 = sphi 0, %s246
      %s263 = sphi 0, %s247
      %s269 = sphi 0, %s271
      %s272 = sphi 0, %s269
      %s273 = sphi 0, %s272
      %s289 = sphi 0, %s273
    $region4: #{tpu_custom_call.1} parent=1 // loop_header_branch
      %21 = sbr.rel (%p19) target = $region8
    $region5: #{tpu_custom_call.1} parent=1 // loop_body
      %s23 = ssub.s32 %s18, 1
      %s24 = ssub.s32 %s18, 2
      %s31 = sadd.s32 1, %s26
      %p32 = scmp.ge.s32.totalorder %s31, 6
      %s33 = scalar_select %p32, 0, %s31
      %s34 = sadd.s32 1, %s25
      %s35 = scalar_select %p32, %s34, %s25
      %p36 = scmp.ge.s32.totalorder %s35, 2
      %s37 = scalar_select %p36, 0, %s35
      %s38 = ssub.s32 %s25, %s37
      %p39 = scmp.eq.s32.totalorder %s38, 0
      %s41 = sadd.s32 %s40, 1
      %s42 = scalar_select %p39, %s40, %s41
      %p45 = pneg %p39
      %p46 = scmp.eq.s32.totalorder %s18, 11
      %p47 = por %p45, %p46
      %p48 = scmp.ne.s32.totalorder %s40, %s43
      %p49 = scmp.eq.s32.totalorder %s18, 0
      %p50 = por %p48, %p49
      %p51 = scmp.ne.s32.totalorder %s40, %s43
      %p52 = scmp.eq.s32.totalorder %s23, 11
      %p53 = por %p51, %p52
      %p54 = scmp.ne.s32.totalorder %s43, %s44
      %p55 = scmp.eq.s32.totalorder %s23, 0
      %p56 = por %p54, %p55
      %p57 = scmp.ne.s32.totalorder %s43, %s44
      %p58 = scmp.eq.s32.totalorder %s24, 11
      %p59 = por %p57, %p58
      %p61 = scmp.ne.s32.totalorder %s44, %s60
      %p62 = scmp.eq.s32.totalorder %s24, 0
      %p63 = por %p61, %p62
      %s65 = sadd.s32 %s64, 1
      %p68 = scmp.eq.s32.totalorder %s18, 11
      %p69 = scmp.ne.s32.totalorder %s64, %s66
      %p70 = scmp.eq.s32.totalorder %s18, 0
      %p71 = por %p69, %p70
      %p72 = scmp.ne.s32.totalorder %s64, %s66
      %p73 = scmp.eq.s32.totalorder %s23, 11
      %p74 = por %p72, %p73
      %p75 = scmp.ne.s32.totalorder %s66, %s67
      %p76 = scmp.eq.s32.totalorder %s23, 0
      %p77 = por %p75, %p76
      %p78 = scmp.ne.s32.totalorder %s66, %s67
      %p79 = scmp.eq.s32.totalorder %s24, 11
      %p80 = por %p78, %p79
      %p82 = scmp.ne.s32.totalorder %s67, %s81
      %p83 = scmp.eq.s32.totalorder %s24, 0
      %p84 = por %p82, %p83
      %s85 = ssub.s32 %s26, %s33
      %p86 = scmp.eq.s32.totalorder %s85, 0
      %s88 = sadd.s32 %s87, 1
      %s89 = scalar_select %p86, %s87, %s88
      %p92 = pneg %p86
      %p93 = scmp.eq.s32.totalorder %s18, 11
      %p94 = por %p92, %p93
      %p95 = scmp.ne.s32.totalorder %s87, %s90
      %p96 = scmp.eq.s32.totalorder %s18, 0
      %p97 = por %p95, %p96
      %p98 = scmp.ne.s32.totalorder %s87, %s90
      %p99 = scmp.eq.s32.totalorder %s23, 11
      %p100 = por %p98, %p99
      %p101 = scmp.ne.s32.totalorder %s90, %s91
      %p102 = scmp.eq.s32.totalorder %s23, 0
      %p103 = por %p101, %p102
      %p104 = scmp.ne.s32.totalorder %s90, %s91
      %p105 = scmp.eq.s32.totalorder %s24, 11
      %p106 = por %p104, %p105
      %p108 = scmp.ne.s32.totalorder %s91, %s107
      %p109 = scmp.eq.s32.totalorder %s24, 0
      %p110 = por %p108, %p109
      %s111 = ssub.s32 %s26, %s33
      %p112 = scmp.eq.s32.totalorder %s111, 0
      %s114 = sadd.s32 %s113, 1
      %s115 = scalar_select %p112, %s113, %s114
      %p118 = pneg %p112
      %p119 = scmp.eq.s32.totalorder %s18, 11
      %p120 = por %p118, %p119
      %p121 = scmp.ne.s32.totalorder %s113, %s116
      %p122 = scmp.eq.s32.totalorder %s18, 0
      %p123 = por %p121, %p122
      %p124 = scmp.ne.s32.totalorder %s113, %s116
      %p125 = scmp.eq.s32.totalorder %s23, 11
      %p126 = por %p124, %p125
      %p127 = scmp.ne.s32.totalorder %s116, %s117
      %p128 = scmp.eq.s32.totalorder %s23, 0
      %p129 = por %p127, %p128
      %p130 = scmp.ne.s32.totalorder %s116, %s117
      %p131 = scmp.eq.s32.totalorder %s24, 11
      %p132 = por %p130, %p131
      %p134 = scmp.ne.s32.totalorder %s117, %s133
      %p135 = scmp.eq.s32.totalorder %s24, 0
      %p136 = por %p134, %p135
      %s137 = ssub.s32 %s26, %s33
      %p138 = scmp.eq.s32.totalorder %s137, 0
      %s140 = sadd.s32 %s139, 1
      %s141 = scalar_select %p138, %s139, %s140
      %p144 = pneg %p138
      %p145 = scmp.eq.s32.totalorder %s18, 11
      %p146 = por %p144, %p145
      %p147 = scmp.ne.s32.totalorder %s139, %s142
      %p148 = scmp.eq.s32.totalorder %s18, 0
      %p149 = por %p147, %p148
      %p150 = scmp.ne.s32.totalorder %s139, %s142
      %p151 = scmp.eq.s32.totalorder %s23, 11
      %p152 = por %p150, %p151
      %p153 = scmp.ne.s32.totalorder %s142, %s143
      %p154 = scmp.eq.s32.totalorder %s23, 0
      %p155 = por %p153, %p154
      %p156 = scmp.ne.s32.totalorder %s142, %s143
      %p157 = scmp.eq.s32.totalorder %s24, 11
      %p158 = por %p156, %p157
      %p160 = scmp.ne.s32.totalorder %s143, %s159
      %p161 = scmp.eq.s32.totalorder %s24, 0
      %p162 = por %p160, %p161
      %s163 = ssub.s32 %s26, %s33
      %p164 = scmp.eq.s32.totalorder %s163, 0
      %s166 = sadd.s32 %s165, 1
      %s167 = scalar_select %p164, %s165, %s166
      %p170 = pneg %p164
      %p171 = scmp.eq.s32.totalorder %s18, 11
      %p172 = por %p170, %p171
      %p173 = scmp.ne.s32.totalorder %s165, %s168
      %p174 = scmp.eq.s32.totalorder %s18, 0
      %p175 = por %p173, %p174
      %p176 = scmp.ne.s32.totalorder %s165, %s168
      %p177 = scmp.eq.s32.totalorder %s23, 11
      %p178 = por %p176, %p177
      %p179 = scmp.ne.s32.totalorder %s168, %s169
      %p180 = scmp.eq.s32.totalorder %s23, 0
      %p181 = por %p179, %p180
      %p182 = scmp.ne.s32.totalorder %s168, %s169
      %p183 = scmp.eq.s32.totalorder %s24, 11
      %p184 = por %p182, %p183
      %p186 = scmp.ne.s32.totalorder %s169, %s185
      %p187 = scmp.eq.s32.totalorder %s24, 0
      %p188 = por %p186, %p187
      %s189 = ssub.s32 %s26, %s33
      %p190 = scmp.eq.s32.totalorder %s189, 0
      %s192 = sadd.s32 %s191, 1
      %s193 = scalar_select %p190, %s191, %s192
      %p196 = pneg %p190
      %p197 = scmp.eq.s32.totalorder %s18, 11
      %p198 = por %p196, %p197
      %p199 = scmp.ne.s32.totalorder %s191, %s194
      %p200 = scmp.eq.s32.totalorder %s18, 0
      %p201 = por %p199, %p200
      %p202 = scmp.ne.s32.totalorder %s191, %s194
      %p203 = scmp.eq.s32.totalorder %s23, 11
      %p204 = por %p202, %p203
      %p205 = scmp.ne.s32.totalorder %s194, %s195
      %p206 = scmp.eq.s32.totalorder %s23, 0
      %p207 = por %p205, %p206
      %p208 = scmp.ne.s32.totalorder %s194, %s195
      %p209 = scmp.eq.s32.totalorder %s24, 11
      %p210 = por %p208, %p209
      %p212 = scmp.ne.s32.totalorder %s195, %s211
      %p213 = scmp.eq.s32.totalorder %s24, 0
      %p214 = por %p212, %p213
      %s215 = ssub.s32 %s26, %s33
      %p216 = scmp.eq.s32.totalorder %s215, 0
      %s218 = sadd.s32 %s217, 1
      %s219 = scalar_select %p216, %s217, %s218
      %p222 = pneg %p216
      %p223 = scmp.eq.s32.totalorder %s18, 11
      %p224 = por %p222, %p223
      %p225 = scmp.ne.s32.totalorder %s217, %s220
      %p226 = scmp.eq.s32.totalorder %s18, 0
      %p227 = por %p225, %p226
      %p228 = scmp.ne.s32.totalorder %s217, %s220
      %p229 = scmp.eq.s32.totalorder %s23, 11
      %p230 = por %p228, %p229
      %p231 = scmp.ne.s32.totalorder %s220, %s221
      %p232 = scmp.eq.s32.totalorder %s23, 0
      %p233 = por %p231, %p232
      %p234 = scmp.ne.s32.totalorder %s220, %s221
      %p235 = scmp.eq.s32.totalorder %s24, 11
      %p236 = por %p234, %p235
      %p238 = scmp.ne.s32.totalorder %s221, %s237
      %p239 = scmp.eq.s32.totalorder %s24, 0
      %p240 = por %p238, %p239
      %s241 = ssub.s32 %s26, %s33
      %p242 = scmp.eq.s32.totalorder %s241, 0
      %s244 = sadd.s32 %s243, 1
      %s245 = scalar_select %p242, %s243, %s244
      %p248 = pneg %p242
      %p249 = scmp.eq.s32.totalorder %s18, 11
      %p250 = por %p248, %p249
      %p251 = scmp.ne.s32.totalorder %s243, %s246
      %p252 = scmp.eq.s32.totalorder %s18, 0
      %p253 = por %p251, %p252
      %p254 = scmp.ne.s32.totalorder %s243, %s246
      %p255 = scmp.eq.s32.totalorder %s23, 11
      %p256 = por %p254, %p255
      %p257 = scmp.ne.s32.totalorder %s246, %s247
      %p258 = scmp.eq.s32.totalorder %s23, 0
      %p259 = por %p257, %p258
      %p260 = scmp.ne.s32.totalorder %s246, %s247
      %p261 = scmp.eq.s32.totalorder %s24, 11
      %p262 = por %p260, %p261
      %p264 = scmp.ne.s32.totalorder %s247, %s263
      %p265 = scmp.eq.s32.totalorder %s24, 0
      %p266 = por %p264, %p265
      %s267 = ssub.s32 %s25, %s37
      %p268 = scmp.eq.s32.totalorder %s267, 0
      %s270 = sadd.s32 %s269, 1
      %s271 = scalar_select %p268, %s269, %s270
      %p274 = pneg %p268
      %p275 = scmp.eq.s32.totalorder %s18, 11
      %p276 = por %p274, %p275
      %p277 = scmp.ne.s32.totalorder %s269, %s272
      %p278 = scmp.eq.s32.totalorder %s18, 0
      %p279 = por %p277, %p278
      %p280 = scmp.ne.s32.totalorder %s269, %s272
      %p281 = scmp.eq.s32.totalorder %s23, 11
      %p282 = por %p280, %p281
      %p283 = scmp.ne.s32.totalorder %s272, %s273
      %p284 = scmp.eq.s32.totalorder %s23, 0
      %p285 = por %p283, %p284
      %p286 = scmp.ne.s32.totalorder %s272, %s273
      %p287 = scmp.eq.s32.totalorder %s24, 11
      %p288 = por %p286, %p287
      %p290 = scmp.ne.s32.totalorder %s273, %s289
      %p291 = scmp.eq.s32.totalorder %s24, 0
      %p292 = por %p290, %p291
      %p293 = scmp.le.s32.totalorder 1, %s18
      %p294 = scmp.lt.s32.totalorder %s18, 13
      %p295 = pnand %p293, %p294
      %p296 = pneg %p295
      // Predicated region
      $region9: #{tpu_custom_call.1} parent=5 // pred_check
        _
      $region10: #{tpu_custom_call.1} parent=5 // pred_check_branch
        %298 = sbr.rel (%p295) target = $region12
      $region11: #{tpu_custom_call.1} parent=5 // pred_region
        %s299 = ssub.s32 %s18, 1
        // Predicated region
        $region13: #{tpu_custom_call.1} parent=11 // pred_check
          %p300 = pneg %p77
        $region14: #{tpu_custom_call.1} parent=11 // pred_check_branch
          %302 = sbr.rel (%p300) target = $region16
        $region15: #{tpu_custom_call.1} parent=11 // pred_region
          _
        $region16: #{tpu_custom_call.1} parent=11 // pred_fallthru
          _
      $region12: #{tpu_custom_call.1} parent=5 // pred_fallthru
        _
      %p303 = scmp.lt.s32.totalorder %s18, 12
      // Predicated region
      $region17: #{tpu_custom_call.1} parent=5 // pred_check
        %p304 = pneg %p303
      $region18: #{tpu_custom_call.1} parent=5 // pred_check_branch
        %306 = sbr.rel (%p304) target = $region20
      $region19: #{tpu_custom_call.1} parent=5 // pred_region
        // Predicated region
        $region21: #{tpu_custom_call.1} parent=19 // pred_check
          %p307 = pneg %p50
        $region22: #{tpu_custom_call.1} parent=19 // pred_check_branch
          %309 = sbr.rel (%p307) target = $region24
        $region23: #{tpu_custom_call.1} parent=19 // pred_region
          %p310 = scmp.lt.s32.totalorder %s25, 1
          %s311 = scalar_select %p310, %s25, 1
          %s312 = smul.addr %s311, 8
          %s313 = scalar_lea.vmem %s0, %s312
        $region24: #{tpu_custom_call.1} parent=19 // pred_fallthru
          _
        // Predicated region
        $region25: #{tpu_custom_call.1} parent=19 // pred_check
          %p314 = pneg %p97
        $region26: #{tpu_custom_call.1} parent=19 // pred_check_branch
          %316 = sbr.rel (%p314) target = $region28
        $region27: #{tpu_custom_call.1} parent=19 // pred_region
          %p317 = scmp.lt.s32.totalorder %s26, 5
          %s318 = scalar_select %p317, %s26, 5
          %s319 = smul.addr %s318, 8
          %s320 = scalar_lea.vmem %s2, %s319
        $region28: #{tpu_custom_call.1} parent=19 // pred_fallthru
          _
        // Predicated region
        $region29: #{tpu_custom_call.1} parent=19 // pred_check
          %p321 = pneg %p123
        $region30: #{tpu_custom_call.1} parent=19 // pred_check_branch
          %323 = sbr.rel (%p321) target = $region32
        $region31: #{tpu_custom_call.1} parent=19 // pred_region
          %p324 = scmp.lt.s32.totalorder %s26, 5
          %s325 = scalar_select %p324, %s26, 5
          %s326 = scalar_lea.vmem %s3, %s325
        $region32: #{tpu_custom_call.1} parent=19 // pred_fallthru
          _
        // Predicated region
        $region33: #{tpu_custom_call.1} parent=19 // pred_check
          %p327 = pneg %p149
        $region34: #{tpu_custom_call.1} parent=19 // pred_check_branch
          %329 = sbr.rel (%p327) target = $region36
        $region35: #{tpu_custom_call.1} parent=19 // pred_region
          %p330 = scmp.lt.s32.totalorder %s26, 5
          %s331 = scalar_select %p330, %s26, 5
          %s332 = scalar_lea.vmem %s4, %s331
        $region36: #{tpu_custom_call.1} parent=19 // pred_fallthru
          _
        // Predicated region
        $region37: #{tpu_custom_call.1} parent=19 // pred_check
          %p333 = pneg %p175
        $region38: #{tpu_custom_call.1} parent=19 // pred_check_branch
          %335 = sbr.rel (%p333) target = $region40
        $region39: #{tpu_custom_call.1} parent=19 // pred_region
          %p336 = scmp.lt.s32.totalorder %s26, 5
          %s337 = scalar_select %p336, %s26, 5
          %s338 = smul.addr %s337, 4
          %s339 = smul.addr %s338, 4
          %s340 = scalar_lea.vmem %s5, %s339
        $region40: #{tpu_custom_call.1} parent=19 // pred_fallthru
          _
        // Predicated region
        $region41: #{tpu_custom_call.1} parent=19 // pred_check
          %p341 = pneg %p201
        $region42: #{tpu_custom_call.1} parent=19 // pred_check_branch
          %343 = sbr.rel (%p341) target = $region44
        $region43: #{tpu_custom_call.1} parent=19 // pred_region
          %p344 = scmp.lt.s32.totalorder %s26, 5
          %s345 = scalar_select %p344, %s26, 5
          %s346 = smul.addr %s345, 4
          %s347 = smul.addr %s346, 4
          %s348 = scalar_lea.vmem %s6, %s347
        $region44: #{tpu_custom_call.1} parent=19 // pred_fallthru
          _
        // Predicated region
        $region45: #{tpu_custom_call.1} parent=19 // pred_check
          %p349 = pneg %p227
        $region46: #{tpu_custom_call.1} parent=19 // pred_check_branch
          %351 = sbr.rel (%p349) target = $region48
        $region47: #{tpu_custom_call.1} parent=19 // pred_region
          %p352 = scmp.lt.s32.totalorder %s26, 5
          %s353 = scalar_select %p352, %s26, 5
          %s354 = smul.addr %s353, 4
          %s355 = smul.addr %s354, 4
          %s356 = scalar_lea.vmem %s7, %s355
        $region48: #{tpu_custom_call.1} parent=19 // pred_fallthru
          _
        // Predicated region
        $region49: #{tpu_custom_call.1} parent=19 // pred_check
          %p357 = pneg %p253
        $region50: #{tpu_custom_call.1} parent=19 // pred_check_branch
          %359 = sbr.rel (%p357) target = $region52
        $region51: #{tpu_custom_call.1} parent=19 // pred_region
          %p360 = scmp.lt.s32.totalorder %s26, 5
          %s361 = scalar_select %p360, %s26, 5
          %s362 = smul.addr %s361, 16
          %s363 = smul.addr %s362, 4
          %s364 = scalar_lea.vmem %s8, %s363
        $region52: #{tpu_custom_call.1} parent=19 // pred_fallthru
          _
      $region20: #{tpu_custom_call.1} parent=5 // pred_fallthru
        _
      %p365 = scmp.le.s32.totalorder 1, %s18
      %p366 = scmp.lt.s32.totalorder %s18, 13
      %p367 = pnand %p365, %p366
      %p368 = pneg %p367
      // Predicated region
      $region53: #{tpu_custom_call.1} parent=5 // pred_check
        _
      $region54: #{tpu_custom_call.1} parent=5 // pred_check_branch
        %370 = sbr.rel (%p367) target = $region56
      $region55: #{tpu_custom_call.1} parent=5 // pred_region
        %s371 = ssub.s32 %s18, 1
        %p372 = scmp.lt.s32.totalorder %s27, 1
        %s373 = scalar_select %p372, %s27, 1
        %s374 = smul.addr %s373, 8
        %s375 = scalar_lea.vmem %s0, %s374
        %p376 = pneg %p56
        %p377 = pneg %p53
        %p378 = pneg %p77
        %p379 = pneg %p74
        %p380 = scmp.lt.s32.totalorder %s28, 5
        %s381 = scalar_select %p380, %s28, 5
        %s382 = smul.addr %s381, 8
        %s383 = scalar_lea.vmem %s2, %s382
        %p384 = pneg %p103
        %p385 = pneg %p100
        %p386 = scmp.lt.s32.totalorder %s28, 5
        %s387 = scalar_select %p386, %s28, 5
        %s388 = scalar_lea.vmem %s3, %s387
        %p389 = pneg %p129
        %p390 = pneg %p126
        %p391 = scmp.lt.s32.totalorder %s28, 5
        %s392 = scalar_select %p391, %s28, 5
        %s393 = scalar_lea.vmem %s4, %s392
        %p394 = pneg %p155
        %p395 = pneg %p152
        %p396 = scmp.lt.s32.totalorder %s28, 5
        %s397 = scalar_select %p396, %s28, 5
        %s398 = smul.addr %s397, 4
        %s399 = smul.addr %s398, 4
        %s400 = scalar_lea.vmem %s5, %s399
        %p401 = pneg %p181
        %p402 = pneg %p178
        %p403 = scmp.lt.s32.totalorder %s28, 5
        %s404 = scalar_select %p403, %s28, 5
        %s405 = smul.addr %s404, 4
        %s406 = smul.addr %s405, 4
        %s407 = scalar_lea.vmem %s6, %s406
        %p408 = pneg %p207
        %p409 = pneg %p204
        %p410 = scmp.lt.s32.totalorder %s28, 5
        %s411 = scalar_select %p410, %s28, 5
        %s412 = smul.addr %s411, 4
        %s413 = smul.addr %s412, 4
        %s414 = scalar_lea.vmem %s7, %s413
        %p415 = pneg %p233
        %p416 = pneg %p230
        %p417 = scmp.lt.s32.totalorder %s28, 5
        %s418 = scalar_select %p417, %s28, 5
        %s419 = smul.addr %s418, 16
        %s420 = smul.addr %s419, 4
        %s421 = scalar_lea.vmem %s8, %s420
        %p422 = pneg %p259
        %p423 = pneg %p256
        %p424 = pneg %p285
        %p425 = pneg %p282
        %s426 = sand.u32 %s272, 1
        %s427 = scalar_lea.sflag [#allocation5], %s426
        %s428 = sand.u32 %s272, 1
        %s429 = scalar_lea.vmem [#allocation4], %s428
        %p430 = scmp.lt.s32.totalorder %s27, 1
        %s431 = scalar_select %p430, %s27, 1
        %s432 = smul.addr %s431, 8
        %s433 = scalar_lea.vmem %s0, %s432
        %p434 = scmp.lt.s32.totalorder %s28, 5
        %s435 = scalar_select %p434, %s28, 5
        %s436 = smul.addr %s435, 8
        %s437 = scalar_lea.vmem %s2, %s436
        %p438 = scmp.lt.s32.totalorder %s28, 5
        %s439 = scalar_select %p438, %s28, 5
        %s440 = scalar_lea.vmem %s3, %s439
        %p441 = scmp.lt.s32.totalorder %s28, 5
        %s442 = scalar_select %p441, %s28, 5
        %s443 = scalar_lea.vmem %s4, %s442
        %p444 = scmp.lt.s32.totalorder %s28, 5
        %s445 = scalar_select %p444, %s28, 5
        %s446 = smul.addr %s445, 4
        %s447 = smul.addr %s446, 4
        %s448 = scalar_lea.vmem %s5, %s447
        %p449 = scmp.lt.s32.totalorder %s28, 5
        %s450 = scalar_select %p449, %s28, 5
        %s451 = smul.addr %s450, 4
        %s452 = smul.addr %s451, 4
        %s453 = scalar_lea.vmem %s6, %s452
        %p454 = scmp.lt.s32.totalorder %s28, 5
        %s455 = scalar_select %p454, %s28, 5
        %s456 = smul.addr %s455, 4
        %s457 = smul.addr %s456, 4
        %s458 = scalar_lea.vmem %s7, %s457
        %p459 = scmp.lt.s32.totalorder %s28, 5
        %s460 = scalar_select %p459, %s28, 5
        %s461 = smul.addr %s460, 16
        %s462 = smul.addr %s461, 4
        %s463 = scalar_lea.vmem %s8, %s462
        %p465 = scmp.eq.s32.totalorder %s28, 0
        // Predicated region
        $region57: #{tpu_custom_call.1} parent=55 // pred_check
          %p466 = pneg %p465
        $region58: #{tpu_custom_call.1} parent=55 // pred_check_branch
          %468 = sbr.rel (%p466) target = $region60
        $region59: #{tpu_custom_call.1} parent=55 // pred_region
          %v469 = vld [vmem:[%s433] sm:$0xff]
          %v470 = vld [vmem:[%s1] sm:$0xff]
          %v471 = vadd.f32 %v469, %v470
          %vm472 = vcmask 261120
          %473 = vst.msk [vmem:[#allocation2] sm:$0xff] %vm472, %v471
          %v474 = vld [vmem:[%s433] sm:$0xff]
          %v475 = vsel %vm472, %v474, 0.0
          %v476 = vrot.slane %v475, 4
          %v477 = vadd.f32 %v475, %v476
          %v478 = vrot.slane %v477, 2
          %v479 = vadd.f32 %v477, %v478
          %v480 = vrot.slane %v479, 1
          %v481 = vadd.f32 %v479, %v480
          %v482 = vrcp.pop 8.0
          %v483 = vmul.f32 8.0, %v482
          %v484 = vsub.f32 1.0, %v483
          %v485 = vmul.f32 %v482, %v484
          %v486 = vadd.f32 %v482, %v485
          %vm487 = vweird.f32 %v482
          %v488 = vsel %vm487, %v482, %v486
          %v489 = vmul.f32 %v481, %v488
          %vm490 = vcmask 253952
          %491 = vst.msk [vmem:[#allocation3] sm:$0x1] %vm490, %v489
        $region60: #{tpu_custom_call.1} parent=55 // pred_fallthru
          _
        %v492 = vld [vmem:[%s437] sm:$0x3f]
        %v493 = vld [vmem:[#allocation2] sm:$0xff]
        %vm494 = vcmask 261120
        %v495 = vsel %vm494, %v493, 0.0
        %496 = vadd.xlane.f32.xlu0 %v495
        %v497 = vpop.xlane.xlu0 %496
        %v498 = vrcp.pop 32.0
        %v499 = vmul.f32 32.0, %v498
        %v500 = vsub.f32 1.0, %v499
        %v501 = vmul.f32 %v498, %v500
        %v502 = vadd.f32 %v498, %v501
        %vm503 = vweird.f32 %v498
        %v504 = vsel %vm503, %v498, %v502
        %v505 = vmul.f32 %v497, %v504
        %v506 = vsub.f32 %v493, %v505
        %v507 = vmul.f32 %v506, %v506
        %v508 = vsel %vm494, %v507, 0.0
        %509 = vadd.xlane.f32.xlu0 %v508
        %v510 = vpop.xlane.xlu0 %509
        %v511 = vmul.f32 %v510, %v504
        %v512 = vadd.f32 %v511, 1e-12
        %v513 = vrsqrt.pop %v512
        %v514 = vmul.f32 %v513, %v512
        %v515 = vmul.f32 %v514, %v513
        %v516 = vmul.f32 0.5, %v515
        %v517 = vsub.f32 1.5, %v516
        %v518 = vmul.f32 %v513, %v517
        %vm519 = vweird.f32 %v512
        %vm520 = vweird.f32 %v513
        %vm521 = vmor %vm519, %vm520
        %v522 = vsel %vm521, %v513, %v518
        %v523 = vmul.f32 %v506, %v522
        %v524 = vperm.slane %v492, 0
        %v525 = vmul.f32 %v524, %v523
        %v526 = vperm.slane %v492, 1
        %v527 = vadd.f32 %v525, %v526
        %v528 = vpack.c.bf16 %v527, %v527
        %v529 = vld [vmem:[%s448] sm:$0xf]
        %v530 = vld [vmem:[%s448 + $0x4] sm:$0xf]
        %v531 = vld [vmem:[%s448 + $0x8] sm:$0xf]
        %v532 = vld [vmem:[%s448 + $0xc] sm:$0xf]
        %v533 = vld [vmem:[%s440] sm:$0x1]
        %v535 = vperm.slane %v533, 0
        %v541 = vunpack.c.l.b16 %v529
        %v542 = vunpack.c.l.b16 %v530
        %v543 = vunpack.c.l.b16 %v531
        %v544 = vunpack.c.l.b16 %v532
        %v545 = vpack.c.b16 %v542, %v541
        %v546 = vpack.c.b16 %v544, %v543
        %v550 = vsel %vm494, %v528, 0
        %552 = vmatpush.bf16.msra.mxu0 0
        %553 = vmatpush.bf16.msra.mxu0 0
        %554 = vmatpush.bf16.msra.mxu0 0
        %555 = vmatpush.bf16.msra.mxu0 0
        %556 = vmatpush.bf16.msra.mxu0 0
        %557 = vmatpush.bf16.msra.mxu0 0
        %558 = vmatpush.bf16.msra.mxu0 %v546
        %559 = vmatpush.bf16.msra.mxu0 %v545
        %560 = vmatmul.bf16.gmra.mxu0 %v550
        %v561 = vpop.f32.mrf.mxu0
        %v562 = vadd.f32 %v535, %v561
        %v563 = vpop.f32.mrf.mxu0
        %564 = vdwg.mxu0
        %v565 = vpack.c.bf16 %v562, %v562
        %v567 = vunpack.c.l.b16 %v565
        %v568 = vpack.c.b16 %v567, %v567
        %569 = vrot.lane.b32.xlu0 %v568, 96
        %v570 = vpop.permute.xlu0 %569
        %vm571 = vcmask 64512
        %v573 = vsel %vm571, %v565, 0
        %v576 = vsel %vm571, %v570, 0
        %578 = vmatpush.bf16.xpose.msra.mxu0 0
        %579 = vmatpush.bf16.xpose.msra.mxu0 0
        %580 = vmatpush.bf16.xpose.msra.mxu0 0
        %581 = vmatpush.bf16.xpose.msra.mxu0 0
        %582 = vmatpush.bf16.xpose.msra.mxu0 0
        %583 = vmatpush.bf16.xpose.msra.mxu0 0
        %584 = vmatpush.bf16.xpose.msra.mxu0 0
        %585 = vmatpush.bf16.xpose.msra.mxu0 %v576
        %586 = vmatmul.bf16.gmra.mxu0 %v573
        %v587 = vpop.f32.mrf.mxu0
        %v588 = vadd.f32 0.0, %v587
        %v589 = vpop.f32.mrf.mxu0
        %590 = vdwg.mxu0
        %v591 = vsel %vm571, %v588, -inf
        %592 = vmax.xlane.f32.xlu0 %v591
        %v593 = vpop.xlane.xlu0 %592
        %v594 = vsub.f32 %v588, %v593
        %v595 = vmul.f32 %v594, 1.442695
        %v596 = vpow.pop %v595
        %v597 = vsel %vm571, %v596, 0.0
        %598 = vadd.xlane.f32.xlu0 %v597
        %v599 = vpop.xlane.xlu0 %598
        %v600 = vrcp.pop %v599
        %v601 = vmul.f32 %v596, %v600
        %v602 = vpack.c.bf16 %v601, %v601
        %603 = vrot.lane.b32.xlu0 %v568, 64
        %v604 = vpop.permute.xlu0 %603
        %v606 = vsel %vm571, %v602, 0
        %vm608 = vcmask 1043456
        %v610 = vsel %vm608, %v604, 0
        %612 = vmatpush.bf16.msra.mxu0 0
        %613 = vmatpush.bf16.msra.mxu0 0
        %614 = vmatpush.bf16.msra.mxu0 0
        %615 = vmatpush.bf16.msra.mxu0 0
        %616 = vmatpush.bf16.msra.mxu0 0
        %617 = vmatpush.bf16.msra.mxu0 0
        %618 = vmatpush.bf16.msra.mxu0 0
        %619 = vmatpush.bf16.msra.mxu0 %v610
        %620 = vmatmul.bf16.gmra.mxu0 %v606
        %v621 = vpop.f32.mrf.mxu0
        %v622 = vadd.f32 0.0, %v621
        %v623 = vpop.f32.mrf.mxu0
        %624 = vdwg.mxu0
        %625 = vrot.lane.b32.xlu0 %v568, 120
        %v626 = vpop.permute.xlu0 %625
        %627 = vrot.lane.b32.xlu0 %v568, 88
        %v628 = vpop.permute.xlu0 %627
        %v630 = vsel %vm571, %v626, 0
        %v633 = vsel %vm571, %v628, 0
        %635 = vmatpush.bf16.xpose.msra.mxu0 0
        %636 = vmatpush.bf16.xpose.msra.mxu0 0
        %637 = vmatpush.bf16.xpose.msra.mxu0 0
        %638 = vmatpush.bf16.xpose.msra.mxu0 0
        %639 = vmatpush.bf16.xpose.msra.mxu0 0
        %640 = vmatpush.bf16.xpose.msra.mxu0 0
        %641 = vmatpush.bf16.xpose.msra.mxu0 0
        %642 = vmatpush.bf16.xpose.msra.mxu0 %v633
        %643 = vmatmul.bf16.gmra.mxu0 %v630
        %v644 = vpop.f32.mrf.mxu0
        %v645 = vadd.f32 0.0, %v644
        %v646 = vpop.f32.mrf.mxu0
        %647 = vdwg.mxu0
        %v648 = vsel %vm571, %v645, -inf
        %649 = vmax.xlane.f32.xlu0 %v648
        %v650 = vpop.xlane.xlu0 %649
        %v651 = vsub.f32 %v645, %v650
        %v652 = vmul.f32 %v651, 1.442695
        %v653 = vpow.pop %v652
        %v654 = vsel %vm571, %v653, 0.0
        %655 = vadd.xlane.f32.xlu0 %v654
        %v656 = vpop.xlane.xlu0 %655
        %v657 = vrcp.pop %v656
        %v658 = vmul.f32 %v653, %v657
        %v659 = vpack.c.bf16 %v658, %v658
        %660 = vrot.lane.b32.xlu0 %v568, 56
        %v661 = vpop.permute.xlu0 %660
        %v663 = vsel %vm571, %v659, 0
        %v666 = vsel %vm608, %v661, 0
        %668 = vmatpush.bf16.msra.mxu0 0
        %669 = vmatpush.bf16.msra.mxu0 0
        %670 = vmatpush.bf16.msra.mxu0 0
        %671 = vmatpush.bf16.msra.mxu0 0
        %672 = vmatpush.bf16.msra.mxu0 0
        %673 = vmatpush.bf16.msra.mxu0 0
        %674 = vmatpush.bf16.msra.mxu0 0
        %675 = vmatpush.bf16.msra.mxu0 %v666
        %676 = vmatmul.bf16.gmra.mxu0 %v663
        %v677 = vpop.f32.mrf.mxu0
        %v678 = vadd.f32 0.0, %v677
        %v679 = vpop.f32.mrf.mxu0
        %680 = vdwg.mxu0
        %681 = vrot.lane.b32.xlu0 %v568, 112
        %v682 = vpop.permute.xlu0 %681
        %683 = vrot.lane.b32.xlu0 %v568, 80
        %v684 = vpop.permute.xlu0 %683
        %v686 = vsel %vm571, %v682, 0
        %v689 = vsel %vm571, %v684, 0
        %691 = vmatpush.bf16.xpose.msra.mxu0 0
        %692 = vmatpush.bf16.xpose.msra.mxu0 0
        %693 = vmatpush.bf16.xpose.msra.mxu0 0
        %694 = vmatpush.bf16.xpose.msra.mxu0 0
        %695 = vmatpush.bf16.xpose.msra.mxu0 0
        %696 = vmatpush.bf16.xpose.msra.mxu0 0
        %697 = vmatpush.bf16.xpose.msra.mxu0 0
        %698 = vmatpush.bf16.xpose.msra.mxu0 %v689
        %699 = vmatmul.bf16.gmra.mxu0 %v686
        %v700 = vpop.f32.mrf.mxu0
        %v701 = vadd.f32 0.0, %v700
        %v702 = vpop.f32.mrf.mxu0
        %703 = vdwg.mxu0
        %v704 = vsel %vm571, %v701, -inf
        %705 = vmax.xlane.f32.xlu0 %v704
        %v706 = vpop.xlane.xlu0 %705
        %v707 = vsub.f32 %v701, %v706
        %v708 = vmul.f32 %v707, 1.442695
        %v709 = vpow.pop %v708
        %v710 = vsel %vm571, %v709, 0.0
        %711 = vadd.xlane.f32.xlu0 %v710
        %v712 = vpop.xlane.xlu0 %711
        %v713 = vrcp.pop %v712
        %v714 = vmul.f32 %v709, %v713
        %v715 = vpack.c.bf16 %v714, %v714
        %716 = vrot.lane.b32.xlu0 %v568, 48
        %v717 = vpop.permute.xlu0 %716
        %v719 = vsel %vm571, %v715, 0
        %v722 = vsel %vm608, %v717, 0
        %724 = vmatpush.bf16.msra.mxu0 0
        %725 = vmatpush.bf16.msra.mxu0 0
        %726 = vmatpush.bf16.msra.mxu0 0
        %727 = vmatpush.bf16.msra.mxu0 0
        %728 = vmatpush.bf16.msra.mxu0 0
        %729 = vmatpush.bf16.msra.mxu0 0
        %730 = vmatpush.bf16.msra.mxu0 0
        %731 = vmatpush.bf16.msra.mxu0 %v722
        %732 = vmatmul.bf16.gmra.mxu0 %v719
        %v733 = vpop.f32.mrf.mxu0
        %v734 = vadd.f32 0.0, %v733
        %v735 = vpop.f32.mrf.mxu0
        %736 = vdwg.mxu0
        %737 = vrot.lane.b32.xlu0 %v568, 104
        %v738 = vpop.permute.xlu0 %737
        %739 = vrot.lane.b32.xlu0 %v568, 72
        %v740 = vpop.permute.xlu0 %739
        %v742 = vsel %vm571, %v738, 0
        %v745 = vsel %vm571, %v740, 0
        %747 = vmatpush.bf16.xpose.msra.mxu0 0
        %748 = vmatpush.bf16.xpose.msra.mxu0 0
        %749 = vmatpush.bf16.xpose.msra.mxu0 0
        %750 = vmatpush.bf16.xpose.msra.mxu0 0
        %751 = vmatpush.bf16.xpose.msra.mxu0 0
        %752 = vmatpush.bf16.xpose.msra.mxu0 0
        %753 = vmatpush.bf16.xpose.msra.mxu0 0
        %754 = vmatpush.bf16.xpose.msra.mxu0 %v745
        %755 = vmatmul.bf16.gmra.mxu0 %v742
        %v756 = vpop.f32.mrf.mxu0
        %v757 = vadd.f32 0.0, %v756
        %v758 = vpop.f32.mrf.mxu0
        %759 = vdwg.mxu0
        %v760 = vsel %vm571, %v757, -inf
        %761 = vmax.xlane.f32.xlu0 %v760
        %v762 = vpop.xlane.xlu0 %761
        %v763 = vsub.f32 %v757, %v762
        %v764 = vmul.f32 %v763, 1.442695
        %v765 = vpow.pop %v764
        %v766 = vsel %vm571, %v765, 0.0
        %767 = vadd.xlane.f32.xlu0 %v766
        %v768 = vpop.xlane.xlu0 %767
        %v769 = vrcp.pop %v768
        %v770 = vmul.f32 %v765, %v769
        %v771 = vpack.c.bf16 %v770, %v770
        %772 = vrot.lane.b32.xlu0 %v568, 40
        %v773 = vpop.permute.xlu0 %772
        %v775 = vsel %vm571, %v771, 0
        %v778 = vsel %vm608, %v773, 0
        %780 = vmatpush.bf16.msra.mxu0 0
        %781 = vmatpush.bf16.msra.mxu0 0
        %782 = vmatpush.bf16.msra.mxu0 0
        %783 = vmatpush.bf16.msra.mxu0 0
        %784 = vmatpush.bf16.msra.mxu0 0
        %785 = vmatpush.bf16.msra.mxu0 0
        %786 = vmatpush.bf16.msra.mxu0 0
        %787 = vmatpush.bf16.msra.mxu0 %v778
        %788 = vmatmul.bf16.gmra.mxu0 %v775
        %v789 = vpop.f32.mrf.mxu0
        %v790 = vadd.f32 0.0, %v789
        %v791 = vpop.f32.mrf.mxu0
        %792 = vdwg.mxu0
        %794 = vrot.lane.b32.xlu0 %v678, 8
        %v795 = vpop.permute.xlu0 %794
        %798 = vrot.lane.b32.xlu0 %v734, 16
        %v799 = vpop.permute.xlu0 %798
        %802 = vrot.lane.b32.xlu0 %v790, 24
        %v803 = vpop.permute.xlu0 %802
        %v805 = vsel %vm571, %v622, %v795
        %vm806 = vcmask 130048
        %v807 = vsel %vm806, %v805, %v799
        %vm808 = vcmask 195584
        %v809 = vsel %vm808, %v807, %v803
        %v810 = vpack.c.bf16 %v809, %v809
        %v811 = vld [vmem:[%s453] sm:$0xf]
        %v812 = vld [vmem:[%s453 + $0x4] sm:$0xf]
        %v813 = vld [vmem:[%s453 + $0x8] sm:$0xf]
        %v814 = vld [vmem:[%s453 + $0xc] sm:$0xf]
        %v819 = vunpack.c.l.b16 %v811
        %v820 = vunpack.c.l.b16 %v812
        %v821 = vunpack.c.l.b16 %v813
        %v822 = vunpack.c.l.b16 %v814
        %v823 = vpack.c.b16 %v820, %v819
        %v824 = vpack.c.b16 %v822, %v821
        %v828 = vsel %vm494, %v810, 0
        %830 = vmatpush.bf16.msra.mxu0 0
        %831 = vmatpush.bf16.msra.mxu0 0
        %832 = vmatpush.bf16.msra.mxu0 0
        %833 = vmatpush.bf16.msra.mxu0 0
        %834 = vmatpush.bf16.msra.mxu0 0
        %835 = vmatpush.bf16.msra.mxu0 0
        %836 = vmatpush.bf16.msra.mxu0 %v824
        %837 = vmatpush.bf16.msra.mxu0 %v823
        %838 = vmatmul.bf16.gmra.mxu0 %v828
        %v839 = vpop.f32.mrf.mxu0
        %v840 = vadd.f32 0.0, %v839
        %v841 = vpop.f32.mrf.mxu0
        %842 = vdwg.mxu0
        %v843 = vadd.f32 %v493, %v840
        %v844 = vperm.slane %v492, 2
        %v845 = vadd.f32 %v843, %v844
        %v846 = vsel %vm494, %v845, 0.0
        %847 = vadd.xlane.f32.xlu0 %v846
        %v848 = vpop.xlane.xlu0 %847
        %v849 = vmul.f32 %v848, %v504
        %v850 = vsub.f32 %v845, %v849
        %v851 = vmul.f32 %v850, %v850
        %v852 = vsel %vm494, %v851, 0.0
        %853 = vadd.xlane.f32.xlu0 %v852
        %v854 = vpop.xlane.xlu0 %853
        %v855 = vmul.f32 %v854, %v504
        %v856 = vadd.f32 %v855, 1e-12
        %v857 = vrsqrt.pop %v856
        %v858 = vmul.f32 %v857, %v856
        %v859 = vmul.f32 %v858, %v857
        %v860 = vmul.f32 0.5, %v859
        %v861 = vsub.f32 1.5, %v860
        %v862 = vmul.f32 %v857, %v861
        %vm863 = vweird.f32 %v856
        %vm864 = vweird.f32 %v857
        %vm865 = vmor %vm863, %vm864
        %v866 = vsel %vm865, %v857, %v862
        %v867 = vmul.f32 %v850, %v866
        %v868 = vperm.slane %v492, 3
        %v869 = vmul.f32 %v868, %v867
        %v870 = vperm.slane %v492, 4
        %v871 = vadd.f32 %v869, %v870
        %v872 = vpack.c.bf16 %v871, %v871
        %v873 = vld [vmem:[%s458] sm:$0xf]
        %v874 = vld [vmem:[%s458 + $0x4] sm:$0xf]
        %v875 = vld [vmem:[%s458 + $0x8] sm:$0xf]
        %v876 = vld [vmem:[%s458 + $0xc] sm:$0xf]
        %v877 = vld [vmem:[%s443] sm:$0x1]
        %v879 = vperm.slane %v877, 0
        %v885 = vunpack.c.l.b16 %v873
        %v886 = vunpack.c.l.b16 %v874
        %v887 = vunpack.c.l.b16 %v875
        %v888 = vunpack.c.l.b16 %v876
        %v889 = vpack.c.b16 %v886, %v885
        %v890 = vpack.c.b16 %v888, %v887
        %v894 = vsel %vm494, %v872, 0
        %896 = vmatpush.bf16.msra.mxu0 0
        %897 = vmatpush.bf16.msra.mxu0 0
        %898 = vmatpush.bf16.msra.mxu0 0
        %899 = vmatpush.bf16.msra.mxu0 0
        %900 = vmatpush.bf16.msra.mxu0 0
        %901 = vmatpush.bf16.msra.mxu0 0
        %902 = vmatpush.bf16.msra.mxu0 %v890
        %903 = vmatpush.bf16.msra.mxu0 %v889
        %904 = vmatmul.bf16.gmra.mxu0 %v894
        %v905 = vpop.f32.mrf.mxu0
        %v906 = vadd.f32 %v879, %v905
        %v907 = vpop.f32.mrf.mxu0
        %908 = vdwg.mxu0
        %v909 = vmul.f32 %v906, 1.702
        %v910 = vxor.u32 %v909, 2147483648
        %v911 = vmul.f32 %v910, 1.442695
        %v912 = vpow.pop %v911
        %v913 = vadd.f32 %v912, 1.0
        %v914 = vrcp.pop %v913
        %v915 = vmul.f32 %v913, %v914
        %v916 = vsub.f32 1.0, %v915
        %v917 = vmul.f32 %v914, %v916
        %v918 = vadd.f32 %v914, %v917
        %vm919 = vweird.f32 %v913
        %vm920 = vweird.f32 %v914
        %vm921 = vmor %vm919, %vm920
        %v922 = vsel %vm921, %v914, %v918
        %v923 = vand.u32 2147483647, %v913
        %vm924 = vcmp.eq.f32.partialorder %v923, 8.507059e+37
        %v925 = vand.u32 %v913, 2147483648
        %v926 = vor.u32 1.1754944e-38, %v925
        %v927 = vsel %vm924, %v926, %v922
        %v928 = vmul.f32 1.0, %v927
        %v929 = vmul.f32 %v906, %v928
        %v930 = vpack.c.bf16 %v929, %v929
        %v931 = vld [vmem:[%s463] sm:$0xf]
        %v932 = vld [vmem:[%s463 + $0x4] sm:$0xf]
        %v933 = vld [vmem:[%s463 + $0x8] sm:$0xf]
        %v934 = vld [vmem:[%s463 + $0xc] sm:$0xf]
        %v935 = vld [vmem:[%s463 + $0x10] sm:$0xf]
        %v936 = vld [vmem:[%s463 + $0x14] sm:$0xf]
        %v937 = vld [vmem:[%s463 + $0x18] sm:$0xf]
        %v938 = vld [vmem:[%s463 + $0x1c] sm:$0xf]
        %v939 = vld [vmem:[%s463 + $0x20] sm:$0xf]
        %v940 = vld [vmem:[%s463 + $0x24] sm:$0xf]
        %v941 = vld [vmem:[%s463 + $0x28] sm:$0xf]
        %v942 = vld [vmem:[%s463 + $0x2c] sm:$0xf]
        %v943 = vld [vmem:[%s463 + $0x30] sm:$0xf]
        %v944 = vld [vmem:[%s463 + $0x34] sm:$0xf]
        %v945 = vld [vmem:[%s463 + $0x38] sm:$0xf]
        %v946 = vld [vmem:[%s463 + $0x3c] sm:$0xf]
        %v963 = vunpack.c.l.b16 %v931
        %v964 = vunpack.c.l.b16 %v932
        %v965 = vunpack.c.l.b16 %v933
        %v966 = vunpack.c.l.b16 %v934
        %v967 = vunpack.c.l.b16 %v935
        %v968 = vunpack.c.l.b16 %v936
        %v969 = vunpack.c.l.b16 %v937
        %v970 = vunpack.c.l.b16 %v938
        %v971 = vunpack.c.l.b16 %v939
        %v972 = vunpack.c.l.b16 %v940
        %v973 = vunpack.c.l.b16 %v941
        %v974 = vunpack.c.l.b16 %v942
        %v975 = vunpack.c.l.b16 %v943
        %v976 = vunpack.c.l.b16 %v944
        %v977 = vunpack.c.l.b16 %v945
        %v978 = vunpack.c.l.b16 %v946
        %v979 = vpack.c.b16 %v964, %v963
        %v980 = vpack.c.b16 %v966, %v965
        %v981 = vpack.c.b16 %v968, %v967
        %v982 = vpack.c.b16 %v970, %v969
        %v983 = vpack.c.b16 %v972, %v971
        %v984 = vpack.c.b16 %v974, %v973
        %v985 = vpack.c.b16 %v976, %v975
        %v986 = vpack.c.b16 %v978, %v977
        %995 = vmatpush.bf16.msra.mxu0 %v986
        %996 = vmatpush.bf16.msra.mxu0 %v985
        %997 = vmatpush.bf16.msra.mxu0 %v984
        %998 = vmatpush.bf16.msra.mxu0 %v983
        %999 = vmatpush.bf16.msra.mxu0 %v982
        %1000 = vmatpush.bf16.msra.mxu0 %v981
        %1001 = vmatpush.bf16.msra.mxu0 %v980
        %1002 = vmatpush.bf16.msra.mxu0 %v979
        %1003 = vmatmul.bf16.gmra.mxu0 %v930
        %v1004 = vpop.f32.mrf.mxu0
        %v1005 = vadd.f32 0.0, %v1004
        %v1006 = vpop.f32.mrf.mxu0
        %1007 = vdwg.mxu0
        %v1008 = vadd.f32 %v845, %v1005
        %v1009 = vperm.slane %v492, 5
        %v1010 = vadd.f32 %v1008, %v1009
        %1011 = vst.msk [vmem:[#allocation2] sm:$0xff] %vm494, %v1010
        %p1012 = scmp.eq.s32.totalorder %s28, 5
        // Predicated region
        $region61: #{tpu_custom_call.1} parent=55 // pred_check
          %p1013 = pneg %p1012
        $region62: #{tpu_custom_call.1} parent=55 // pred_check_branch
          %1015 = sbr.rel (%p1013) target = $region64
        $region63: #{tpu_custom_call.1} parent=55 // pred_region
          %v1016 = vsel %vm494, %v1010, 0.0
          %v1017 = vrot.slane %v1016, 4
          %v1018 = vadd.f32 %v1016, %v1017
          %v1019 = vrot.slane %v1018, 2
          %v1020 = vadd.f32 %v1018, %v1019
          %v1021 = vrot.slane %v1020, 1
          %v1022 = vadd.f32 %v1020, %v1021
          %v1023 = vrcp.pop 8.0
          %v1024 = vmul.f32 8.0, %v1023
          %v1025 = vsub.f32 1.0, %v1024
          %v1026 = vmul.f32 %v1023, %v1025
          %v1027 = vadd.f32 %v1023, %v1026
          %vm1028 = vweird.f32 %v1023
          %v1029 = vsel %vm1028, %v1023, %v1027
          %v1030 = vmul.f32 %v1022, %v1029
          %v1031 = vld [vmem:[#allocation3] sm:$0x1]
          %v1032 = vadd.f32 %v1030, %v1031
          %vm1033 = vcmask 253952
          %1034 = vst.msk [vmem:[%s429] sm:$0x1] %vm1033, %v1032
        $region64: #{tpu_custom_call.1} parent=55 // pred_fallthru
          _
        %s1035 = sand.u32 %s272, 1
        %s1036 = scalar_lea.sflag [#allocation5], %s1035
        %s1037 = sand.u32 %s272, 1
        %s1038 = scalar_lea.vmem [#allocation4], %s1037
        // Predicated region
        $region65: #{tpu_custom_call.1} parent=55 // pred_check
          %p1039 = pneg %p282
        $region66: #{tpu_custom_call.1} parent=55 // pred_check_branch
          %1041 = sbr.rel (%p1039) target = $region68
        $region67: #{tpu_custom_call.1} parent=55 // pred_region
          %1043 = vsyncadd %s1036, 0
          %s1044 = scalar_lea.hbm %s9, %s27
          %s1046 = sshll.u32 %s1038, 4
          %s1047 = int_to_ptr.vmem [resolvable:$true] %s1046
          %s1048 = sshll.u32 %s1044, 4
          %s1049 = int_to_ptr.hbm [resolvable:$true] %s1048
          %1051 = dma.vmem_to_hbm [thread:$0]  %s1047, 16, %s1049, %s1036
        $region68: #{tpu_custom_call.1} parent=55 // pred_fallthru
          _
      $region56: #{tpu_custom_call.1} parent=5 // pred_fallthru
        _
      %p1052 = scmp.le.s32.totalorder 2, %s18
      // Predicated region
      $region69: #{tpu_custom_call.1} parent=5 // pred_check
        %p1053 = pneg %p1052
      $region70: #{tpu_custom_call.1} parent=5 // pred_check_branch
        %1055 = sbr.rel (%p1053) target = $region72
      $region71: #{tpu_custom_call.1} parent=5 // pred_region
        %s1056 = ssub.s32 %s18, 2
        // Predicated region
        $region73: #{tpu_custom_call.1} parent=71 // pred_check
          %p1057 = pneg %p288
        $region74: #{tpu_custom_call.1} parent=71 // pred_check_branch
          %1059 = sbr.rel (%p1057) target = $region76
        $region75: #{tpu_custom_call.1} parent=71 // pred_region
          %s1060 = sand.u32 %s273, 1
          %s1061 = scalar_lea.sflag [#allocation5], %s1060
          %s1062 = sand.u32 %s273, 1
          %s1063 = scalar_lea.vmem [#allocation4], %s1062
          %1065 = dma.done %s1061, 16
        $region76: #{tpu_custom_call.1} parent=71 // pred_fallthru
          _
      $region72: #{tpu_custom_call.1} parent=5 // pred_fallthru
        _
    $region6: #{tpu_custom_call.1} parent=1 // loop_footer
      %s22 = sadd.s32 1, %s18
    $region7: #{tpu_custom_call.1} parent=1 // loop_footer_branch
      %17 = sbr.rel target = $region3
    $region8: #{tpu_custom_call.1} parent=1 // loop_exit
      _
    %1066 = vsyncpa [#allocation5], 1
    %s1067 = scalar_lea.sflag [#allocation5], 1
    %1068 = vsyncpa %s1067, 1

</llo_original>
